<compile_context>
chip_gen: v7x
topology: tpu7x:2x2x1
jax: 0.10.0
libtpu: 0.0.40
codegen_flags: <defaults>
</compile_context>

<pallas_src>
import functools
import math

import jax
import jax.numpy as jnp
from jax import lax
from jax.experimental import pallas as pl
from jax.experimental.pallas import tpu as pltpu


def _attention_core(q, k, v, wo_ref, bo_ref, out_ref, *, h: int, d_k: int):
    """q: (tq, D) f32 (scale pre-folded), k/v: (S_kv, D) f32; writes out_ref[0]."""
    tq = q.shape[0]
    S = k.shape[0]
    D = h * d_k
    bf16 = jnp.bfloat16

    # Head split (S, D) -> (h, S, d_k).  Leading-batch layout so every contraction
    # below is a single batched MXU dot_general (no per-head Python loop).
    # TODO(synk): remove these relayouts via non-leading-batch dot_general and a
    #             (D, h, d_k)-reshaped W_O fold once Mosaic lowers those reliably.
    q3 = jnp.transpose(q.reshape(tq, h, d_k), (1, 0, 2)).astype(bf16)  # (h, tq, d_k)
    k3 = jnp.transpose(k.reshape(S, h, d_k), (1, 0, 2)).astype(bf16)   # (h, S, d_k)
    v3 = jnp.transpose(v.reshape(S, h, d_k), (1, 0, 2)).astype(bf16)   # (h, S, d_k)

    # scores[h, i, j] = sum_d q3[h, i, d] * k3[h, j, d]   (no in-kernel k.T)
    scores = lax.dot_general(q3, k3, (((2,), (2,)), ((0,), (0,))),
                             preferred_element_type=jnp.float32)       # (h, tq, S)

    # Numerically stable softmax over the key axis, fully in f32 with exact
    # division so results track the PyTorch module tightly.
    scores = scores - jnp.max(scores, axis=-1, keepdims=True)
    p = jnp.exp(scores)
    p = p / jnp.sum(p, axis=-1, keepdims=True)
    # TODO(synk): dropout on attention probabilities omitted (inference identity).

    # ctx[h, i, d] = sum_j p[h, i, j] * v3[h, j, d]
    ctx = lax.dot_general(p.astype(bf16), v3, (((2,), (1,)), ((0,), (0,))),
                          preferred_element_type=jnp.float32)          # (h, tq, d_k)

    # Head concat + output projection x @ W_O.T (wo_ref already holds W_O.T, bf16).
    x = jnp.transpose(ctx, (1, 0, 2)).reshape(tq, D).astype(bf16)
    out = lax.dot_general(x, wo_ref[...], (((1,), (0,)), ((), ())),
                          preferred_element_type=jnp.float32) + bo_ref[...]
    out_ref[0] = out.astype(out_ref.dtype)


def _mha_self_kernel(x_ref, wqkv_ref, bqkv_ref, wo_ref, bo_ref, out_ref, *,
                     h: int, d_k: int, tq: int, nq: int):
    """Self-attention path: ONE fused (S, D) x (D, 3D) projection GEMM."""
    D = h * d_k
    xb = x_ref[0].astype(jnp.bfloat16)                                  # (S, D)
    qkv = lax.dot_general(xb, wqkv_ref[...], (((1,), (0,)), ((), ())),
                          preferred_element_type=jnp.float32) + bqkv_ref[...]
    q_full = qkv[:, :D]
    k = qkv[:, D:2 * D]
    v = qkv[:, 2 * D:]
    if nq == 1:                       # static (trace-time) branch
        q = q_full
    else:
        q = lax.dynamic_slice_in_dim(q_full, pl.program_id(1) * tq, tq, axis=0)
    _attention_core(q, k, v, wo_ref, bo_ref, out_ref, h=h, d_k=d_k)


def _mha_cross_kernel(q_ref, k_ref, v_ref, wqkv_ref, bqkv_ref, wo_ref, bo_ref,
                      out_ref, *, h: int, d_k: int):
    """General path (distinct Q/K/V): 3 GEMMs, one packed weight DMA stream."""
    D = h * d_k
    dn = (((1,), (0,)), ((), ()))
    bf16 = jnp.bfloat16
    q = lax.dot_general(q_ref[0].astype(bf16), wqkv_ref[:, :D], dn,
                        preferred_element_type=jnp.float32) + bqkv_ref[:, :D]
    k = lax.dot_general(k_ref[0].astype(bf16), wqkv_ref[:, D:2 * D], dn,
                        preferred_element_type=jnp.float32) + bqkv_ref[:, D:2 * D]
    v = lax.dot_general(v_ref[0].astype(bf16), wqkv_ref[:, 2 * D:], dn,
                        preferred_element_type=jnp.float32) + bqkv_ref[:, 2 * D:]
    _attention_core(q, k, v, wo_ref, bo_ref, out_ref, h=h, d_k=d_k)


def _pack_params(params, d_k: int):
    """One-time host-side packing of nn.Linear-convention (out, in) weights.

    * Stores W.T so the kernel does plain x @ W (no in-kernel transpose).
    * Folds the 1/sqrt(d_k) attention scale into W_Q / b_Q.
    * Pre-casts weight matrices to bf16 (MXU dtype -> half the HBM->VMEM bytes);
      biases stay f32 (added after the f32-accumulated matmul).
    """
    scale = 1.0 / math.sqrt(d_k)
    wq_t = params["W_Q"].T.astype(jnp.float32) * scale
    wk_t = params["W_K"].T.astype(jnp.float32)
    wv_t = params["W_V"].T.astype(jnp.float32)
    w_qkv = jnp.concatenate([wq_t, wk_t, wv_t], axis=1).astype(jnp.bfloat16)  # (D, 3D)
    b_qkv = jnp.concatenate(
        [params["b_Q"] * scale, params["b_K"], params["b_V"]],
        axis=0).astype(jnp.float32)[None, :]                                  # (1, 3D)
    w_o = params["W_O"].T.astype(jnp.bfloat16)                                # (D, D)
    b_o = params["b_O"].astype(jnp.float32)[None, :]                          # (1, D)
    return w_qkv, b_qkv, w_o, b_o


def _vmem_limit_bytes(s_kv: int, tq: int, D: int, h: int, d_k: int) -> int:
    """VMEM budget: pipelined I/O + weights + honest in-body intermediate count."""
    # Runtime-pipelined operands (double-buffered): Q tile, K, V, out, weights.
    io = 2 * (tq * D * 4 + 2 * s_kv * D * 4 + tq * D * 4)
    wt = 2 * (D * 3 * D * 2 + 3 * D * 4 + D * D * 2 + D * 4)
    # In-body: fused qkv / q,k,v f32, bf16 head views, scores + exp + prob buffers,
    # bf16 probs, ctx, concat x (bf16 + f32 out).
    body = ((tq + 2 * s_kv) * D * (4 + 2)
            + 3 * s_kv * D * 4                     # fused-path (S, 3D) qkv buffer
            + 3 * h * tq * s_kv * 4 + h * tq * s_kv * 2
            + h * tq * d_k * 4 + tq * D * (2 + 4))
    need = io + wt + body + (4 << 20)              # compiler-internal scratch room
    try:
        phys = pltpu.get_tpu_info().vmem_capacity_bytes
    except Exception:
        phys = 64 << 20                            # v7x has the smallest VMEM
    return int(min(max(need, 32 << 20), int(phys * 0.85)))


def multi_head_attention(Q, K, V, params, *, h: int):
    """Q: (B, S_q, D); K, V: (B, S_kv, D).  Returns (B, S_q, D)."""
    B, S_q, D = Q.shape
    assert K.shape == V.shape and K.shape[0] == B and K.shape[2] == D
    S_kv = K.shape[1]
    assert D % h == 0, "d_model must be divisible by h"
    d_k = D // h

    w_qkv, b_qkv, w_o, b_o = _pack_params(params, d_k)

    # Query-tile grid axis: bounds the (h, tq, S_kv) score buffer and gives v7x's
    # two TensorCores parallel work even at batch 1.  256-row tiles line up with
    # the 256-wide MXU passes on v6e/v7x.
    tq = 256 if (S_q > 256 and S_q % 256 == 0) else S_q
    nq = S_q // tq

    qtile_spec = pl.BlockSpec((1, tq, D), lambda b, qi: (b, qi, 0))
    kv_spec = pl.BlockSpec((1, S_kv, D), lambda b, qi: (b, 0, 0))
    # TODO(synk): single-buffer the grid-invariant weight blocks
    #             (pipeline_mode=pl.Buffered(1)) once supported by the top-level
    #             TPU pipeline; halves resident weight VMEM at large D.
    wqkv_spec = pl.BlockSpec((D, 3 * D), lambda b, qi: (0, 0))
    bqkv_spec = pl.BlockSpec((1, 3 * D), lambda b, qi: (0, 0))
    wo_spec = pl.BlockSpec((D, D), lambda b, qi: (0, 0))
    bo_spec = pl.BlockSpec((1, D), lambda b, qi: (0, 0))
    out_spec = pl.BlockSpec((1, tq, D), lambda b, qi: (b, qi, 0))

    compiler_params = pltpu.CompilerParams(
        dimension_semantics=("parallel", "parallel"),
        vmem_limit_bytes=_vmem_limit_bytes(S_kv, tq, D, h, d_k))

    if (Q is K) and (K is V):
        kernel = functools.partial(_mha_self_kernel, h=h, d_k=d_k, tq=tq, nq=nq)
        in_specs = [kv_spec, wqkv_spec, bqkv_spec, wo_spec, bo_spec]
        operands = (Q, w_qkv, b_qkv, w_o, b_o)
    else:
        kernel = functools.partial(_mha_cross_kernel, h=h, d_k=d_k)
        in_specs = [qtile_spec, kv_spec, kv_spec,
                    wqkv_spec, bqkv_spec, wo_spec, bo_spec]
        operands = (Q, K, V, w_qkv, b_qkv, w_o, b_o)

    return pl.pallas_call(
        kernel,
        out_shape=jax.ShapeDtypeStruct((B, S_q, D), Q.dtype),
        grid_spec=pl.GridSpec(grid=(B, nq), in_specs=in_specs, out_specs=out_spec),
        compiler_params=compiler_params,
    )(*operands)


def init_params(key, d_model: int):
    """Deterministic init mirroring nn.Linear shapes: W (out, in), b (out,)."""
    keys = jax.random.split(key, 8)
    bound = 1.0 / math.sqrt(d_model)

    def lin(kw, kb):
        w = jax.random.uniform(kw, (d_model, d_model), jnp.float32, -bound, bound)
        b = jax.random.uniform(kb, (d_model,), jnp.float32, -bound, bound)
        return w, b

    wq, bq = lin(keys[0], keys[1])
    wk, bk = lin(keys[2], keys[3])
    wv, bv = lin(keys[4], keys[5])
    wo, bo = lin(keys[6], keys[7])
    return {"W_Q": wq, "b_Q": bq, "W_K": wk, "b_K": bk,
            "W_V": wv, "b_V": bv, "W_O": wo, "b_O": bo}


def mha_reference(Q, K, V, params, *, h: int):
    """Pure-JAX f32 reference mirroring the PyTorch module."""
    B, S, D = Q.shape
    d_k = D // h

    def lin(x, w, b):
        return jnp.einsum("bsd,od->bso", x, w) + b

    q = lin(Q, params["W_Q"], params["b_Q"]).reshape(B, S, h, d_k).transpose(0, 2, 1, 3)
    k = lin(K, params["W_K"], params["b_K"]).reshape(B, K.shape[1], h, d_k).transpose(0, 2, 1, 3)
    v = lin(V, params["W_V"], params["b_V"]).reshape(B, V.shape[1], h, d_k).transpose(0, 2, 1, 3)
    s = jnp.einsum("bhqd,bhkd->bhqk", q, k) / math.sqrt(d_k)
    p = jax.nn.softmax(s, axis=-1)
    x = jnp.einsum("bhqk,bhkd->bhqd", p, v).transpose(0, 2, 1, 3).reshape(B, S, D)
    return lin(x, params["W_O"], params["b_O"])


if __name__ == "__main__":
    # Small shapes consistent with the module: batch=2, seq=8, d_model=32, heads=4.
    B, S, D, H = 2, 8, 32, 4

    key = jax.random.PRNGKey(0)
    k_q, k_k, k_v, k_p = jax.random.split(key, 4)
    Q = jax.random.normal(k_q, (B, S, D), jnp.float32)
    K = jax.random.normal(k_k, (B, S, D), jnp.float32)
    V = jax.random.normal(k_v, (B, S, D), jnp.float32)
    params = init_params(k_p, D)

    # General (cross-attention) path.
    out = jax.block_until_ready(multi_head_attention(Q, K, V, params, h=H))
    assert out.shape == (B, S, D)
    err = float(jnp.max(jnp.abs(out - mha_reference(Q, K, V, params, h=H))))
    assert err < 1e-1, f"cross-attention mismatch vs reference: max abs err {err}"

    # Fused-QKV self-attention path (Q is K is V).
    out_self = jax.block_until_ready(multi_head_attention(Q, Q, Q, params, h=H))
    assert out_self.shape == (B, S, D)
    err_self = float(jnp.max(jnp.abs(out_self - mha_reference(Q, Q, Q, params, h=H))))
    assert err_self < 1e-1, f"self-attention mismatch vs reference: max abs err {err_self}"

    print("KERNEL_OK")
</pallas_src>

<mosaic_0001>
module attributes {stable_mosaic.version = 11 : i64} {
  func.func @_mha_cross_kernel(%arg0: i32, %arg1: i32, %arg2: memref<1x8x32xf32, #tpu.memory_space<vmem>>, %arg3: memref<1x8x32xf32, #tpu.memory_space<vmem>>, %arg4: memref<1x8x32xf32, #tpu.memory_space<vmem>>, %arg5: memref<32x96xbf16, #tpu.memory_space<vmem>>, %arg6: memref<1x96xf32, #tpu.memory_space<vmem>>, %arg7: memref<32x32xbf16, #tpu.memory_space<vmem>>, %arg8: memref<1x32xf32, #tpu.memory_space<vmem>>, %arg9: memref<1x8x32xf32, #tpu.memory_space<vmem>>) attributes {dimension_semantics = [#tpu.dimension_semantics<parallel>, #tpu.dimension_semantics<parallel>], iteration_bounds = array<i64: 2, 1>, scalar_prefetch = 0 : i64, scratch_operands = 0 : i64, tpu.core_type = #tpu.core_type<tc>, window_params = [{transform_indices = @transform_0, window_bounds = array<i64: 1, 8, 32>}, {transform_indices = @transform_1, window_bounds = array<i64: 1, 8, 32>}, {transform_indices = @transform_2, window_bounds = array<i64: 1, 8, 32>}, {pipeline_mode = #tpu.pipeline_mode<synchronous>, transform_indices = @transform_3, window_bounds = array<i64: 32, 96>}, {pipeline_mode = #tpu.pipeline_mode<synchronous>, transform_indices = @transform_4, window_bounds = array<i64: 1, 96>}, {pipeline_mode = #tpu.pipeline_mode<synchronous>, transform_indices = @transform_5, window_bounds = array<i64: 32, 32>}, {pipeline_mode = #tpu.pipeline_mode<synchronous>, transform_indices = @transform_6, window_bounds = array<i64: 1, 32>}, {transform_indices = @transform_7, window_bounds = array<i64: 1, 8, 32>}]} {
    %c0 = arith.constant 0 : index
    %c0_0 = arith.constant 0 : index
    %c0_1 = arith.constant 0 : index
    %0 = vector.load %arg2[%c0, %c0_0, %c0_1] : memref<1x8x32xf32, #tpu.memory_space<vmem>>, vector<1x8x32xf32>
    %1 = vector.shape_cast %0 : vector<1x8x32xf32> to vector<8x32xf32>
    %2 = arith.truncf %1 : vector<8x32xf32> to vector<8x32xbf16>
    %c0_2 = arith.constant 0 : index
    %c0_3 = arith.constant 0 : index
    %3 = vector.load %arg5[%c0_2, %c0_3] : memref<32x96xbf16, #tpu.memory_space<vmem>>, vector<32x32xbf16>
    %cst = arith.constant dense<0.000000e+00> : vector<8x32xf32>
    %4 = tpu.matmul %2, %3, %cst {dimension_numbers = #tpu.dot_dimension_numbers<[1], [0], [0], [1], [0, 0, 1, 1], [], []>} : vector<8x32xbf16>, vector<32x32xbf16>, vector<8x32xf32> -> vector<8x32xf32>
    %c0_4 = arith.constant 0 : index
    %c0_5 = arith.constant 0 : index
    %5 = vector.load %arg6[%c0_4, %c0_5] : memref<1x96xf32, #tpu.memory_space<vmem>>, vector<1x32xf32>
    %6 = vector.broadcast %5 : vector<1x32xf32> to vector<8x32xf32>
    %7 = arith.addf %4, %6 : vector<8x32xf32>
    %c0_6 = arith.constant 0 : index
    %c0_7 = arith.constant 0 : index
    %c0_8 = arith.constant 0 : index
    %8 = vector.load %arg3[%c0_6, %c0_7, %c0_8] : memref<1x8x32xf32, #tpu.memory_space<vmem>>, vector<1x8x32xf32>
    %9 = vector.shape_cast %8 : vector<1x8x32xf32> to vector<8x32xf32>
    %10 = arith.truncf %9 : vector<8x32xf32> to vector<8x32xbf16>
    %c0_9 = arith.constant 0 : index
    %c32 = arith.constant 32 : index
    %11 = vector.load %arg5[%c0_9, %c32] : memref<32x96xbf16, #tpu.memory_space<vmem>>, vector<32x32xbf16>
    %cst_10 = arith.constant dense<0.000000e+00> : vector<8x32xf32>
    %12 = tpu.matmul %10, %11, %cst_10 {dimension_numbers = #tpu.dot_dimension_numbers<[1], [0], [0], [1], [0, 0, 1, 1], [], []>} : vector<8x32xbf16>, vector<32x32xbf16>, vector<8x32xf32> -> vector<8x32xf32>
    %c0_11 = arith.constant 0 : index
    %c32_12 = arith.constant 32 : index
    %13 = vector.load %arg6[%c0_11, %c32_12] : memref<1x96xf32, #tpu.memory_space<vmem>>, vector<1x32xf32>
    %14 = vector.broadcast %13 : vector<1x32xf32> to vector<8x32xf32>
    %15 = arith.addf %12, %14 : vector<8x32xf32>
    %c0_13 = arith.constant 0 : index
    %c0_14 = arith.constant 0 : index
    %c0_15 = arith.constant 0 : index
    %16 = vector.load %arg4[%c0_13, %c0_14, %c0_15] : memref<1x8x32xf32, #tpu.memory_space<vmem>>, vector<1x8x32xf32>
    %17 = vector.shape_cast %16 : vector<1x8x32xf32> to vector<8x32xf32>
    %18 = arith.truncf %17 : vector<8x32xf32> to vector<8x32xbf16>
    %c0_16 = arith.constant 0 : index
    %c64 = arith.constant 64 : index
    %19 = vector.load %arg5[%c0_16, %c64] : memref<32x96xbf16, #tpu.memory_space<vmem>>, vector<32x32xbf16>
    %cst_17 = arith.constant dense<0.000000e+00> : vector<8x32xf32>
    %20 = tpu.matmul %18, %19, %cst_17 {dimension_numbers = #tpu.dot_dimension_numbers<[1], [0], [0], [1], [0, 0, 1, 1], [], []>} : vector<8x32xbf16>, vector<32x32xbf16>, vector<8x32xf32> -> vector<8x32xf32>
    %c0_18 = arith.constant 0 : index
    %c64_19 = arith.constant 64 : index
    %21 = vector.load %arg6[%c0_18, %c64_19] : memref<1x96xf32, #tpu.memory_space<vmem>>, vector<1x32xf32>
    %22 = vector.broadcast %21 : vector<1x32xf32> to vector<8x32xf32>
    %23 = arith.addf %20, %22 : vector<8x32xf32>
    %24 = vector.shape_cast %7 : vector<8x32xf32> to vector<8x4x8xf32>
    %25 = tpu.transpose %24, [1, 0, 2] : vector<8x4x8xf32> -> vector<4x8x8xf32>
    %26 = arith.truncf %25 : vector<4x8x8xf32> to vector<4x8x8xbf16>
    %27 = vector.shape_cast %15 : vector<8x32xf32> to vector<8x4x8xf32>
    %28 = tpu.transpose %27, [1, 0, 2] : vector<8x4x8xf32> -> vector<4x8x8xf32>
    %29 = arith.truncf %28 : vector<4x8x8xf32> to vector<4x8x8xbf16>
    %30 = vector.shape_cast %23 : vector<8x32xf32> to vector<8x4x8xf32>
    %31 = tpu.transpose %30, [1, 0, 2] : vector<8x4x8xf32> -> vector<4x8x8xf32>
    %32 = arith.truncf %31 : vector<4x8x8xf32> to vector<4x8x8xbf16>
    %cst_20 = arith.constant dense<0.000000e+00> : vector<4x8x8xf32>
    %33 = tpu.matmul %26, %29, %cst_20 {dimension_numbers = #tpu.dot_dimension_numbers<[2], [2], [1], [1], [0, 0, 0, 1, 1, 1], [0], [0]>} : vector<4x8x8xbf16>, vector<4x8x8xbf16>, vector<4x8x8xf32> -> vector<4x8x8xf32>
    %cst_21 = arith.constant dense<0xFF800000> : vector<4x8xf32>
    %34 = vector.multi_reduction <maximumf>, %33, %cst_21 [2] : vector<4x8x8xf32> to vector<4x8xf32>
    %35 = vector.shape_cast %34 : vector<4x8xf32> to vector<4x8x1xf32>
    %36 = vector.broadcast %35 : vector<4x8x1xf32> to vector<4x8x8xf32>
    %37 = arith.subf %33, %36 : vector<4x8x8xf32>
    %38 = math.exp %37 : vector<4x8x8xf32>
    %cst_22 = arith.constant dense<0.000000e+00> : vector<4x8xf32>
    %39 = vector.multi_reduction <add>, %38, %cst_22 [2] : vector<4x8x8xf32> to vector<4x8xf32>
    %40 = vector.shape_cast %39 : vector<4x8xf32> to vector<4x8x1xf32>
    %41 = vector.broadcast %40 : vector<4x8x1xf32> to vector<4x8x8xf32>
    %42 = arith.divf %38, %41 : vector<4x8x8xf32>
    %43 = arith.truncf %42 : vector<4x8x8xf32> to vector<4x8x8xbf16>
    %cst_23 = arith.constant dense<0.000000e+00> : vector<4x8x8xf32>
    %44 = tpu.matmul %43, %32, %cst_23 {dimension_numbers = #tpu.dot_dimension_numbers<[2], [1], [1], [2], [0, 0, 0, 1, 1, 2], [0], [0]>} : vector<4x8x8xbf16>, vector<4x8x8xbf16>, vector<4x8x8xf32> -> vector<4x8x8xf32>
    %45 = tpu.transpose %44, [1, 0, 2] : vector<4x8x8xf32> -> vector<8x4x8xf32>
    %46 = vector.shape_cast %45 : vector<8x4x8xf32> to vector<8x32xf32>
    %47 = arith.truncf %46 : vector<8x32xf32> to vector<8x32xbf16>
    %c0_24 = arith.constant 0 : index
    %c0_25 = arith.constant 0 : index
    %48 = vector.load %arg7[%c0_24, %c0_25] : memref<32x32xbf16, #tpu.memory_space<vmem>>, vector<32x32xbf16>
    %cst_26 = arith.constant dense<0.000000e+00> : vector<8x32xf32>
    %49 = tpu.matmul %47, %48, %cst_26 {dimension_numbers = #tpu.dot_dimension_numbers<[1], [0], [0], [1], [0, 0, 1, 1], [], []>} : vector<8x32xbf16>, vector<32x32xbf16>, vector<8x32xf32> -> vector<8x32xf32>
    %c0_27 = arith.constant 0 : index
    %c0_28 = arith.constant 0 : index
    %50 = vector.load %arg8[%c0_27, %c0_28] : memref<1x32xf32, #tpu.memory_space<vmem>>, vector<1x32xf32>
    %51 = vector.broadcast %50 : vector<1x32xf32> to vector<8x32xf32>
    %52 = arith.addf %49, %51 : vector<8x32xf32>
    %c0_29 = arith.constant 0 : index
    %c0_30 = arith.constant 0 : index
    %c0_31 = arith.constant 0 : index
    %53 = vector.load %arg9[%c0_29, %c0_30, %c0_31] : memref<1x8x32xf32, #tpu.memory_space<vmem>>, vector<1x8x32xf32>
    %54 = vector.shape_cast %53 : vector<1x8x32xf32> to vector<8x32xf32>
    %55 = vector.shape_cast %52 : vector<8x32xf32> to vector<1x8x32xf32>
    tpu.vector_store %arg9[%c0_29, %c0_30, %c0_31], %55 {strides = array<i32>} : memref<1x8x32xf32, #tpu.memory_space<vmem>>, vector<1x8x32xf32>,
    return
  }
  func.func @transform_0(%arg0: i32, %arg1: i32) -> (i32, i32, i32) {
    %c0_i32 = arith.constant 0 : i32
    %c0_i32_0 = arith.constant 0 : i32
    return %arg0, %arg1, %c0_i32 : i32, i32, i32
  }
  func.func @transform_1(%arg0: i32, %arg1: i32) -> (i32, i32, i32) {
    %c0_i32 = arith.constant 0 : i32
    %c0_i32_0 = arith.constant 0 : i32
    %c0_i32_1 = arith.constant 0 : i32
    return %arg0, %c0_i32, %c0_i32_0 : i32, i32, i32
  }
  func.func @transform_2(%arg0: i32, %arg1: i32) -> (i32, i32, i32) {
    %c0_i32 = arith.constant 0 : i32
    %c0_i32_0 = arith.constant 0 : i32
    %c0_i32_1 = arith.constant 0 : i32
    return %arg0, %c0_i32, %c0_i32_0 : i32, i32, i32
  }
  func.func @transform_3(%arg0: i32, %arg1: i32) -> (i32, i32) {
    %c0_i32 = arith.constant 0 : i32
    %c0_i32_0 = arith.constant 0 : i32
    %c0_i32_1 = arith.constant 0 : i32
    return %c0_i32, %c0_i32_0 : i32, i32
  }
  func.func @transform_4(%arg0: i32, %arg1: i32) -> (i32, i32) {
    %c0_i32 = arith.constant 0 : i32
    %c0_i32_0 = arith.constant 0 : i32
    %c0_i32_1 = arith.constant 0 : i32
    return %c0_i32, %c0_i32_0 : i32, i32
  }
  func.func @transform_5(%arg0: i32, %arg1: i32) -> (i32, i32) {
    %c0_i32 = arith.constant 0 : i32
    %c0_i32_0 = arith.constant 0 : i32
    %c0_i32_1 = arith.constant 0 : i32
    return %c0_i32, %c0_i32_0 : i32, i32
  }
  func.func @transform_6(%arg0: i32, %arg1: i32) -> (i32, i32) {
    %c0_i32 = arith.constant 0 : i32
    %c0_i32_0 = arith.constant 0 : i32
    %c0_i32_1 = arith.constant 0 : i32
    return %c0_i32, %c0_i32_0 : i32, i32
  }
  func.func @transform_7(%arg0: i32, %arg1: i32) -> (i32, i32, i32) {
    %c0_i32 = arith.constant 0 : i32
    %c0_i32_0 = arith.constant 0 : i32
    return %arg0, %arg1, %c0_i32 : i32, i32, i32
  }
}

</mosaic_0001>

<llo_original>
// kernel: tpu_custom_call.1
$region0: #{tpu_custom_call.1}
  #allocation0 [shape = 'u32[]', space=smem, size = 0x4, offset = 0x4, fixed_abs, tag = 'smem constant byte address 0x4 - core index']
  #allocation1 [shape = 'u32[144,128]{1,0:T(1,128)}', space=vmem, size = 0x12000, scoped, tag = 'internal scratch']
  %s0 = inlined_call_operand.hbm [shape: f32[2,8,32], index: 0, kind: input, shape index: {}]
  %s1 = inlined_call_operand.hbm [shape: f32[2,8,32], index: 1, kind: input, shape index: {}]
  %s2 = inlined_call_operand.hbm [shape: f32[2,8,32], index: 2, kind: input, shape index: {}]
  %s3 = inlined_call_operand.hbm [shape: bf16[32,96], index: 3, kind: input, shape index: {}]
  %s4 = inlined_call_operand.vmem [shape: f32[1,96], index: 4, kind: input, shape index: {}]
  %s5 = inlined_call_operand.vmem [shape: bf16[32,32], index: 5, kind: input, shape index: {}]
  %s6 = inlined_call_operand.vmem [shape: f32[1,32], index: 6, kind: input, shape index: {}]
  %s7 = inlined_call_operand.hbm [shape: f32[2,8,32], index: 7, kind: output, shape index: {}]
  %s8 = sld [smem:[#allocation0]]
  $region77: #{tpu_custom_call.1} parent=0
    _
  %s10 = ssub.s32 1, %s8
  %s11 = scalar_select 0, %s10, %s8
  $region1: #{tpu_custom_call.1} parent=0
    #allocation2 [shape = 'u8[8192]{0}', space=vmem, size = 0x2000, scoped, tag = 'input window, operand 0']
    #allocation3 [shape = 's32[2]{0}', space=sflag, size = 0x8, scoped, tag = 'scoped memory for tpu_custom_call.1']
    #allocation4 [shape = 's32[2]{0}', space=sflag, size = 0x8, scoped, tag = 'scoped memory for tpu_custom_call.1']
    #allocation5 [shape = 'u8[8192]{0}', space=vmem, size = 0x2000, scoped, tag = 'input window, operand 1']
    #allocation6 [shape = 's32[2]{0}', space=sflag, size = 0x8, scoped, tag = 'scoped memory for tpu_custom_call.1']
    #allocation7 [shape = 'u8[8192]{0}', space=vmem, size = 0x2000, scoped, tag = 'input window, operand 2']
    #allocation8 [shape = 'u8[8192]{0}', space=vmem, size = 0x2000, scoped, tag = 'input window, operand 3, single buffered']
    #allocation9 [shape = 's32[1]{0}', space=sflag, size = 0x4, scoped, tag = 'scoped memory for tpu_custom_call.1']
    #allocation10 [shape = 'u8[8192]{0}', space=vmem, size = 0x2000, scoped, tag = 'output window, operand 0']
    %12 = vsyncpa [#allocation3], 0
    %s13 = scalar_lea.sflag [#allocation3], 1
    %14 = vsyncpa %s13, 0
    %15 = vsyncpa [#allocation6], 0
    %s16 = scalar_lea.sflag [#allocation6], 1
    %17 = vsyncpa %s16, 0
    %18 = vsyncpa [#allocation9], 0
    %19 = vsyncpa [#allocation4], 0
    %s20 = scalar_lea.sflag [#allocation4], 1
    %21 = vsyncpa %s20, 0
    loop: start=0, step=1, limit=4
    $region2: #{tpu_custom_call.1} parent=1 // loop_pre_header
      _
    $region3: #{tpu_custom_call.1} parent=1 // loop_header
      %s23 = sphi 0, %s27
      %p24 = scmp.ge.s32.totalorder %s23, 4
      %s30 = sphi 0, %s42
      %s31 = sphi 0, %s38
      %s32 = sphi 0, %s30
      %s33 = sphi 0, %s31
      %s34 = sphi 0, %s32
      %s35 = sphi 0, %s33
      %s47 = sphi 0, %s49
      %s50 = sphi 0, %s47
      %s51 = sphi 0, %s50
      %s67 = sphi 0, %s51
      %s73 = sphi 0, %s75
      %s76 = sphi 0, %s73
      %s77 = sphi 0, %s76
      %s93 = sphi 0, %s77
      %s99 = sphi 0, %s101
      %s102 = sphi 0, %s99
      %s103 = sphi 0, %s102
      %s119 = sphi 0, %s103
      %s123 = sphi 0, %s123
      %s125 = sphi 0, %s123
      %s126 = sphi 0, %s125
      %s140 = sphi 0, %s126
      %s144 = sphi 0, %s144
      %s146 = sphi 0, %s144
      %s147 = sphi 0, %s146
      %s161 = sphi 0, %s147
      %s165 = sphi 0, %s165
      %s167 = sphi 0, %s165
      %s168 = sphi 0, %s167
      %s182 = sphi 0, %s168
      %s186 = sphi 0, %s186
      %s188 = sphi 0, %s186
      %s189 = sphi 0, %s188
      %s203 = sphi 0, %s189
      %s211 = sphi 0, %s213
      %s214 = sphi 0, %s211
      %s215 = sphi 0, %s214
      %s231 = sphi 0, %s215
    $region4: #{tpu_custom_call.1} parent=1 // loop_header_branch
      %26 = sbr.rel (%p24) target = $region8
    $region5: #{tpu_custom_call.1} parent=1 // loop_body
      %s28 = ssub.s32 %s23, 1
      %s29 = ssub.s32 %s23, 2
      %s36 = sadd.s32 1, %s31
      %p37 = scmp.ge.s32.totalorder %s36, 1
      %s38 = scalar_select %p37, 0, %s36
      %s39 = sadd.s32 1, %s30
      %s40 = scalar_select %p37, %s39, %s30
      %p41 = scmp.ge.s32.totalorder %s40, 2
      %s42 = scalar_select %p41, 0, %s40
      %s43 = ssub.s32 %s30, %s42
      %s44 = ssub.s32 %s31, %s38
      %s45 = sor.u32 %s43, %s44
      %p46 = scmp.eq.s32.totalorder %s45, 0
      %s48 = sadd.s32 %s47, 1
      %s49 = scalar_select %p46, %s47, %s48
      %p52 = pneg %p46
      %p53 = scmp.eq.s32.totalorder %s23, 1
      %p54 = por %p52, %p53
      %p55 = scmp.ne.s32.totalorder %s47, %s50
      %p56 = scmp.eq.s32.totalorder %s23, 0
      %p57 = por %p55, %p56
      %p58 = scmp.ne.s32.totalorder %s47, %s50
      %p59 = scmp.eq.s32.totalorder %s28, 1
      %p60 = por %p58, %p59
      %p61 = scmp.ne.s32.totalorder %s50, %s51
      %p62 = scmp.eq.s32.totalorder %s28, 0
      %p63 = por %p61, %p62
      %p64 = scmp.ne.s32.totalorder %s50, %s51
      %p65 = scmp.eq.s32.totalorder %s29, 1
      %p66 = por %p64, %p65
      %p68 = scmp.ne.s32.totalorder %s51, %s67
      %p69 = scmp.eq.s32.totalorder %s29, 0
      %p70 = por %p68, %p69
      %s71 = ssub.s32 %s30, %s42
      %p72 = scmp.eq.s32.totalorder %s71, 0
      %s74 = sadd.s32 %s73, 1
      %s75 = scalar_select %p72, %s73, %s74
      %p78 = pneg %p72
      %p79 = scmp.eq.s32.totalorder %s23, 1
      %p80 = por %p78, %p79
      %p81 = scmp.ne.s32.totalorder %s73, %s76
      %p82 = scmp.eq.s32.totalorder %s23, 0
      %p83 = por %p81, %p82
      %p84 = scmp.ne.s32.totalorder %s73, %s76
      %p85 = scmp.eq.s32.totalorder %s28, 1
      %p86 = por %p84, %p85
      %p87 = scmp.ne.s32.totalorder %s76, %s77
      %p88 = scmp.eq.s32.totalorder %s28, 0
      %p89 = por %p87, %p88
      %p90 = scmp.ne.s32.totalorder %s76, %s77
      %p91 = scmp.eq.s32.totalorder %s29, 1
      %p92 = por %p90, %p91
      %p94 = scmp.ne.s32.totalorder %s77, %s93
      %p95 = scmp.eq.s32.totalorder %s29, 0
      %p96 = por %p94, %p95
      %s97 = ssub.s32 %s30, %s42
      %p98 = scmp.eq.s32.totalorder %s97, 0
      %s100 = sadd.s32 %s99, 1
      %s101 = scalar_select %p98, %s99, %s100
      %p104 = pneg %p98
      %p105 = scmp.eq.s32.totalorder %s23, 1
      %p106 = por %p104, %p105
      %p107 = scmp.ne.s32.totalorder %s99, %s102
      %p108 = scmp.eq.s32.totalorder %s23, 0
      %p109 = por %p107, %p108
      %p110 = scmp.ne.s32.totalorder %s99, %s102
      %p111 = scmp.eq.s32.totalorder %s28, 1
      %p112 = por %p110, %p111
      %p113 = scmp.ne.s32.totalorder %s102, %s103
      %p114 = scmp.eq.s32.totalorder %s28, 0
      %p115 = por %p113, %p114
      %p116 = scmp.ne.s32.totalorder %s102, %s103
      %p117 = scmp.eq.s32.totalorder %s29, 1
      %p118 = por %p116, %p117
      %p120 = scmp.ne.s32.totalorder %s103, %s119
      %p121 = scmp.eq.s32.totalorder %s29, 0
      %p122 = por %p120, %p121
      %s124 = sadd.s32 %s123, 1
      %p127 = scmp.eq.s32.totalorder %s23, 1
      %p128 = scmp.ne.s32.totalorder %s123, %s125
      %p129 = scmp.eq.s32.totalorder %s23, 0
      %p130 = por %p128, %p129
      %p131 = scmp.ne.s32.totalorder %s123, %s125
      %p132 = scmp.eq.s32.totalorder %s28, 1
      %p133 = por %p131, %p132
      %p134 = scmp.ne.s32.totalorder %s125, %s126
      %p135 = scmp.eq.s32.totalorder %s28, 0
      %p136 = por %p134, %p135
      %p137 = scmp.ne.s32.totalorder %s125, %s126
      %p138 = scmp.eq.s32.totalorder %s29, 1
      %p139 = por %p137, %p138
      %p141 = scmp.ne.s32.totalorder %s126, %s140
      %p142 = scmp.eq.s32.totalorder %s29, 0
      %p143 = por %p141, %p142
      %s145 = sadd.s32 %s144, 1
      %p148 = scmp.eq.s32.totalorder %s23, 1
      %p149 = scmp.ne.s32.totalorder %s144, %s146
      %p150 = scmp.eq.s32.totalorder %s23, 0
      %p151 = por %p149, %p150
      %p152 = scmp.ne.s32.totalorder %s144, %s146
      %p153 = scmp.eq.s32.totalorder %s28, 1
      %p154 = por %p152, %p153
      %p155 = scmp.ne.s32.totalorder %s146, %s147
      %p156 = scmp.eq.s32.totalorder %s28, 0
      %p157 = por %p155, %p156
      %p158 = scmp.ne.s32.totalorder %s146, %s147
      %p159 = scmp.eq.s32.totalorder %s29, 1
      %p160 = por %p158, %p159
      %p162 = scmp.ne.s32.totalorder %s147, %s161
      %p163 = scmp.eq.s32.totalorder %s29, 0
      %p164 = por %p162, %p163
      %s166 = sadd.s32 %s165, 1
      %p169 = scmp.eq.s32.totalorder %s23, 1
      %p170 = scmp.ne.s32.totalorder %s165, %s167
      %p171 = scmp.eq.s32.totalorder %s23, 0
      %p172 = por %p170, %p171
      %p173 = scmp.ne.s32.totalorder %s165, %s167
      %p174 = scmp.eq.s32.totalorder %s28, 1
      %p175 = por %p173, %p174
      %p176 = scmp.ne.s32.totalorder %s167, %s168
      %p177 = scmp.eq.s32.totalorder %s28, 0
      %p178 = por %p176, %p177
      %p179 = scmp.ne.s32.totalorder %s167, %s168
      %p180 = scmp.eq.s32.totalorder %s29, 1
      %p181 = por %p179, %p180
      %p183 = scmp.ne.s32.totalorder %s168, %s182
      %p184 = scmp.eq.s32.totalorder %s29, 0
      %p185 = por %p183, %p184
      %s187 = sadd.s32 %s186, 1
      %p190 = scmp.eq.s32.totalorder %s23, 1
      %p191 = scmp.ne.s32.totalorder %s186, %s188
      %p192 = scmp.eq.s32.totalorder %s23, 0
      %p193 = por %p191, %p192
      %p194 = scmp.ne.s32.totalorder %s186, %s188
      %p195 = scmp.eq.s32.totalorder %s28, 1
      %p196 = por %p194, %p195
      %p197 = scmp.ne.s32.totalorder %s188, %s189
      %p198 = scmp.eq.s32.totalorder %s28, 0
      %p199 = por %p197, %p198
      %p200 = scmp.ne.s32.totalorder %s188, %s189
      %p201 = scmp.eq.s32.totalorder %s29, 1
      %p202 = por %p200, %p201
      %p204 = scmp.ne.s32.totalorder %s189, %s203
      %p205 = scmp.eq.s32.totalorder %s29, 0
      %p206 = por %p204, %p205
      %s207 = ssub.s32 %s30, %s42
      %s208 = ssub.s32 %s31, %s38
      %s209 = sor.u32 %s207, %s208
      %p210 = scmp.eq.s32.totalorder %s209, 0
      %s212 = sadd.s32 %s211, 1
      %s213 = scalar_select %p210, %s211, %s212
      %p216 = pneg %p210
      %p217 = scmp.eq.s32.totalorder %s23, 1
      %p218 = por %p216, %p217
      %p219 = scmp.ne.s32.totalorder %s211, %s214
      %p220 = scmp.eq.s32.totalorder %s23, 0
      %p221 = por %p219, %p220
      %p222 = scmp.ne.s32.totalorder %s211, %s214
      %p223 = scmp.eq.s32.totalorder %s28, 1
      %p224 = por %p222, %p223
      %p225 = scmp.ne.s32.totalorder %s214, %s215
      %p226 = scmp.eq.s32.totalorder %s28, 0
      %p227 = por %p225, %p226
      %p228 = scmp.ne.s32.totalorder %s214, %s215
      %p229 = scmp.eq.s32.totalorder %s29, 1
      %p230 = por %p228, %p229
      %p232 = scmp.ne.s32.totalorder %s215, %s231
      %p233 = scmp.eq.s32.totalorder %s29, 0
      %p234 = por %p232, %p233
      %p235 = scmp.le.s32.totalorder 1, %s23
      %p236 = scmp.lt.s32.totalorder %s23, 3
      %p237 = pnand %p235, %p236
      %p238 = pneg %p237
      // Predicated region
      $region9: #{tpu_custom_call.1} parent=5 // pred_check
        _
      $region10: #{tpu_custom_call.1} parent=5 // pred_check_branch
        %240 = sbr.rel (%p237) target = $region12
      $region11: #{tpu_custom_call.1} parent=5 // pred_region
        %s241 = ssub.s32 %s23, 1
        // Predicated region
        $region13: #{tpu_custom_call.1} parent=11 // pred_check
          %p242 = pneg %p136
        $region14: #{tpu_custom_call.1} parent=11 // pred_check_branch
          %244 = sbr.rel (%p242) target = $region16
        $region15: #{tpu_custom_call.1} parent=11 // pred_region
          %s246 = ssub.s32 256, 256
          %247 = vsyncadd [#allocation9], %s246
          %s248 = sshll.u32 [#allocation8], 4
          %s249 = int_to_ptr.vmem [resolvable:$true] %s248
          %254 = dma.hbm_to_vmem [thread:$0]  %s3, 256, %s249, [#allocation9], 64, 64, 4
        $region16: #{tpu_custom_call.1} parent=11 // pred_fallthru
          _
        // Predicated region
        $region17: #{tpu_custom_call.1} parent=11 // pred_check
          %p255 = pneg %p157
        $region18: #{tpu_custom_call.1} parent=11 // pred_check_branch
          %257 = sbr.rel (%p255) target = $region20
        $region19: #{tpu_custom_call.1} parent=11 // pred_region
          _
        $region20: #{tpu_custom_call.1} parent=11 // pred_fallthru
          _
        // Predicated region
        $region21: #{tpu_custom_call.1} parent=11 // pred_check
          %p258 = pneg %p178
        $region22: #{tpu_custom_call.1} parent=11 // pred_check_branch
          %260 = sbr.rel (%p258) target = $region24
        $region23: #{tpu_custom_call.1} parent=11 // pred_region
          _
        $region24: #{tpu_custom_call.1} parent=11 // pred_fallthru
          _
        // Predicated region
        $region25: #{tpu_custom_call.1} parent=11 // pred_check
          %p261 = pneg %p199
        $region26: #{tpu_custom_call.1} parent=11 // pred_check_branch
          %263 = sbr.rel (%p261) target = $region28
        $region27: #{tpu_custom_call.1} parent=11 // pred_region
          _
        $region28: #{tpu_custom_call.1} parent=11 // pred_fallthru
          _
      $region12: #{tpu_custom_call.1} parent=5 // pred_fallthru
        _
      %p264 = scmp.lt.s32.totalorder %s23, 2
      // Predicated region
      $region29: #{tpu_custom_call.1} parent=5 // pred_check
        %p265 = pneg %p264
      $region30: #{tpu_custom_call.1} parent=5 // pred_check_branch
        %267 = sbr.rel (%p265) target = $region32
      $region31: #{tpu_custom_call.1} parent=5 // pred_region
        // Predicated region
        $region33: #{tpu_custom_call.1} parent=31 // pred_check
          %p268 = pneg %p57
        $region34: #{tpu_custom_call.1} parent=31 // pred_check_branch
          %270 = sbr.rel (%p268) target = $region36
        $region35: #{tpu_custom_call.1} parent=31 // pred_region
          %s271 = sand.u32 %s47, 1
          %s272 = scalar_lea.sflag [#allocation3], %s271
          %s273 = sand.u32 %s47, 1
          %s274 = smul.addr %s273, 8
          %s275 = scalar_lea.vmem [#allocation2], %s274
          %s277 = ssub.s32 128, 128
          %278 = vsyncadd %s272, %s277
          %s279 = sadd.s32 %s31, %s30
          %s280 = smul.addr %s279, 128
          %s281 = scalar_lea.hbm %s0, %s280
          %s283 = sshll.u32 %s275, 4
          %s284 = int_to_ptr.vmem [resolvable:$true] %s283
          %286 = dma.hbm_to_vmem [thread:$0]  %s281, 128, %s284, %s272
        $region36: #{tpu_custom_call.1} parent=31 // pred_fallthru
          _
        // Predicated region
        $region37: #{tpu_custom_call.1} parent=31 // pred_check
          %p287 = pneg %p83
        $region38: #{tpu_custom_call.1} parent=31 // pred_check_branch
          %289 = sbr.rel (%p287) target = $region40
        $region39: #{tpu_custom_call.1} parent=31 // pred_region
          %s290 = sand.u32 %s23, 1
          %s291 = scalar_lea.sflag [#allocation6], %s290
          %s292 = sand.u32 %s73, 1
          %s293 = smul.addr %s292, 8
          %s294 = scalar_lea.vmem [#allocation5], %s293
          %s296 = ssub.s32 128, 128
          %297 = vsyncadd %s291, %s296
          %s298 = smul.addr %s30, 128
          %s299 = scalar_lea.hbm %s1, %s298
          %s301 = sshll.u32 %s294, 4
          %s302 = int_to_ptr.vmem [resolvable:$true] %s301
          %304 = dma.hbm_to_vmem [thread:$0]  %s299, 128, %s302, %s291
        $region40: #{tpu_custom_call.1} parent=31 // pred_fallthru
          _
        // Predicated region
        $region41: #{tpu_custom_call.1} parent=31 // pred_check
          %p305 = pneg %p109
        $region42: #{tpu_custom_call.1} parent=31 // pred_check_branch
          %307 = sbr.rel (%p305) target = $region44
        $region43: #{tpu_custom_call.1} parent=31 // pred_region
          %s308 = sand.u32 %s23, 1
          %s309 = scalar_lea.sflag [#allocation6], %s308
          %s310 = sand.u32 %s99, 1
          %s311 = smul.addr %s310, 8
          %s312 = scalar_lea.vmem [#allocation7], %s311
          %s314 = ssub.s32 128, 128
          %315 = vsyncadd %s309, %s314
          %s316 = smul.addr %s30, 128
          %s317 = scalar_lea.hbm %s2, %s316
          %s319 = sshll.u32 %s312, 4
          %s320 = int_to_ptr.vmem [resolvable:$true] %s319
          %322 = dma.hbm_to_vmem [thread:$0]  %s317, 128, %s320, %s309
        $region44: #{tpu_custom_call.1} parent=31 // pred_fallthru
          _
      $region32: #{tpu_custom_call.1} parent=5 // pred_fallthru
        _
      %p323 = scmp.le.s32.totalorder 1, %s23
      %p324 = scmp.lt.s32.totalorder %s23, 3
      %p325 = pnand %p323, %p324
      %p326 = pneg %p325
      // Predicated region
      $region45: #{tpu_custom_call.1} parent=5 // pred_check
        _
      $region46: #{tpu_custom_call.1} parent=5 // pred_check_branch
        %328 = sbr.rel (%p325) target = $region48
      $region47: #{tpu_custom_call.1} parent=5 // pred_region
        %s329 = ssub.s32 %s23, 1
        %s330 = sand.u32 %s50, 1
        %s331 = scalar_lea.sflag [#allocation3], %s330
        %s332 = sand.u32 %s50, 1
        %s333 = smul.addr %s332, 8
        %s334 = scalar_lea.vmem [#allocation2], %s333
        // Predicated region
        $region49: #{tpu_custom_call.1} parent=47 // pred_check
          %p335 = pneg %p63
        $region50: #{tpu_custom_call.1} parent=47 // pred_check_branch
          %337 = sbr.rel (%p335) target = $region52
        $region51: #{tpu_custom_call.1} parent=47 // pred_region
          %338 = dma.done %s331, 128
        $region52: #{tpu_custom_call.1} parent=47 // pred_fallthru
          _
        %s339 = sand.u32 %s28, 1
        %s340 = scalar_lea.sflag [#allocation6], %s339
        %s341 = sand.u32 %s76, 1
        %s342 = smul.addr %s341, 8
        %s343 = scalar_lea.vmem [#allocation5], %s342
        // Predicated region
        $region53: #{tpu_custom_call.1} parent=47 // pred_check
          %p344 = pneg %p89
        $region54: #{tpu_custom_call.1} parent=47 // pred_check_branch
          %346 = sbr.rel (%p344) target = $region56
        $region55: #{tpu_custom_call.1} parent=47 // pred_region
          %347 = dma.done %s340, 128
        $region56: #{tpu_custom_call.1} parent=47 // pred_fallthru
          _
        %s348 = sand.u32 %s28, 1
        %s349 = scalar_lea.sflag [#allocation6], %s348
        %s350 = sand.u32 %s102, 1
        %s351 = smul.addr %s350, 8
        %s352 = scalar_lea.vmem [#allocation7], %s351
        // Predicated region
        $region57: #{tpu_custom_call.1} parent=47 // pred_check
          %p353 = pneg %p115
        $region58: #{tpu_custom_call.1} parent=47 // pred_check_branch
          %355 = sbr.rel (%p353) target = $region60
        $region59: #{tpu_custom_call.1} parent=47 // pred_region
          %356 = dma.done %s349, 128
        $region60: #{tpu_custom_call.1} parent=47 // pred_fallthru
          _
        // Predicated region
        $region61: #{tpu_custom_call.1} parent=47 // pred_check
          %p357 = pneg %p136
        $region62: #{tpu_custom_call.1} parent=47 // pred_check_branch
          %359 = sbr.rel (%p357) target = $region64
        $region63: #{tpu_custom_call.1} parent=47 // pred_region
          %360 = dma.done [#allocation9], 256
        $region64: #{tpu_custom_call.1} parent=47 // pred_fallthru
          _
        %s361 = sand.u32 %s50, 1
        %s362 = scalar_lea.sflag [#allocation3], %s361
        %s363 = sand.u32 %s50, 1
        %s364 = smul.addr %s363, 8
        %s365 = scalar_lea.vmem [#allocation2], %s364
        %p366 = pneg %p63
        %p367 = pneg %p60
        %s368 = sand.u32 %s28, 1
        %s369 = scalar_lea.sflag [#allocation6], %s368
        %s370 = sand.u32 %s76, 1
        %s371 = smul.addr %s370, 8
        %s372 = scalar_lea.vmem [#allocation5], %s371
        %p373 = pneg %p89
        %p374 = pneg %p86
        %s375 = sand.u32 %s28, 1
        %s376 = scalar_lea.sflag [#allocation6], %s375
        %s377 = sand.u32 %s102, 1
        %s378 = smul.addr %s377, 8
        %s379 = scalar_lea.vmem [#allocation7], %s378
        %p380 = pneg %p115
        %p381 = pneg %p112
        %p382 = pneg %p136
        %p383 = pneg %p133
        %p384 = pneg %p157
        %p385 = pneg %p154
        %p386 = pneg %p178
        %p387 = pneg %p175
        %p388 = pneg %p199
        %p389 = pneg %p196
        %p390 = pneg %p227
        %p391 = pneg %p224
        %s392 = sand.u32 %s214, 1
        %s393 = scalar_lea.sflag [#allocation4], %s392
        %s394 = sand.u32 %s214, 1
        %s395 = smul.addr %s394, 8
        %s396 = scalar_lea.vmem [#allocation10], %s395
        %v398 = vld [vmem:[%s334] sm:$0xff]
        %v399 = vpack.c.bf16 %v398, %v398
        %v400 = vld [vmem:[#allocation8] sm:$0xf]
        %v401 = vld [vmem:[#allocation8 + $0x4] sm:$0xf]
        %v402 = vld [vmem:[#allocation8 + $0x8] sm:$0xf]
        %v403 = vld [vmem:[#allocation8 + $0xc] sm:$0xf]
        %v404 = vld [vmem:[%s4] sm:$0x1]
        %v406 = vlaneseq
        %v407 = vshrl.u32 %v406, 7
        %v408 = vsub.s32 0, %v407
        %v409 = vrot.slane %v404, %v408
        %v415 = vunpack.c.l.b16 %v400
        %v416 = vunpack.c.l.b16 %v401
        %v417 = vunpack.c.l.b16 %v402
        %v418 = vunpack.c.l.b16 %v403
        %v419 = vpack.c.b16 %v416, %v415
        %v420 = vpack.c.b16 %v418, %v417
        %vm423 = vcmask 261120
        %v425 = vsel %vm423, %v399, 0
        %427 = vmatprep.subr.bf16.mxu0 0
        %428 = vmatpush1.bf16.msra.mxu0 %v419
        %429 = vmatprep.subr.bf16.mxu0 0
        %430 = vmatpush1.bf16.msra.mxu0 %v420
        %431 = vmatprep.subr.bf16.mxu0 0
        %432 = vmatpush1.bf16.msra.mxu0 0
        %433 = vmatprep.subr.bf16.mxu0 0
        %434 = vmatpush1.bf16.msra.mxu0 0
        %435 = vmatprep.subr.bf16.mxu0 0
        %436 = vmatpush1.bf16.msra.mxu0 0
        %437 = vmatprep.subr.bf16.mxu0 0
        %438 = vmatpush1.bf16.msra.mxu0 0
        %439 = vmatprep.subr.bf16.mxu0 0
        %440 = vmatpush1.bf16.msra.mxu0 0
        %441 = vmatprep.subr.bf16.mxu0 0
        %442 = vmatpush1.bf16.msra.mxu0 0
        %443 = vmatprep.subr.bf16.mxu0 0
        %444 = vmatpush1.bf16.msra.mxu0 0
        %445 = vmatprep.subr.bf16.mxu0 0
        %446 = vmatpush1.bf16.msra.mxu0 0
        %447 = vmatprep.subr.bf16.mxu0 0
        %448 = vmatpush1.bf16.msra.mxu0 0
        %449 = vmatprep.subr.bf16.mxu0 0
        %450 = vmatpush1.bf16.msra.mxu0 0
        %451 = vmatprep.subr.bf16.mxu0 0
        %452 = vmatpush1.bf16.msra.mxu0 0
        %453 = vmatprep.subr.bf16.mxu0 0
        %454 = vmatpush1.bf16.msra.mxu0 0
        %455 = vmatprep.subr.bf16.mxu0 0
        %456 = vmatpush1.bf16.msra.mxu0 0
        %457 = vmatprep.subr.bf16.mxu0 0
        %458 = vmatpush1.bf16.msra.mxu0 0
        %459 = vmatprep.mubr.bf16.mxu0 0
        %460 = vmatmul.mubr.bf16.gmra.mrb[0].mxu0 %v425
        %v461 = vpop.f32.mrb[0].mxu0
        %v462 = vadd.f32 %v409, %v461
        %v463 = vpop.f32.mrb[0].mxu0
        %v464 = vpop.f32.mrb[0].mxu0
        %v465 = vpop.f32.mrb[0].mxu0
        %466 = vdwg.mxu0
        %v467 = vld [vmem:[%s343] sm:$0xff]
        %v468 = vpack.c.bf16 %v467, %v467
        %469 = vrot.lane.b32.xlu0 %v419, 96
        %v470 = vpop.permute.xlu0 %469
        %471 = vrot.lane.b32.xlu0 %v420, 96
        %v472 = vpop.permute.xlu0 %471
        %475 = vrot.lane.b32.xlu0 %v409, 96
        %v476 = vpop.permute.xlu0 %475
        %v479 = vsel %vm423, %v468, 0
        %481 = vmatprep.subr.bf16.mxu0 0
        %482 = vmatpush1.bf16.msra.mxu0 %v470
        %483 = vmatprep.subr.bf16.mxu0 0
        %484 = vmatpush1.bf16.msra.mxu0 %v472
        %485 = vmatprep.subr.bf16.mxu0 0
        %486 = vmatpush1.bf16.msra.mxu0 0
        %487 = vmatprep.subr.bf16.mxu0 0
        %488 = vmatpush1.bf16.msra.mxu0 0
        %489 = vmatprep.subr.bf16.mxu0 0
        %490 = vmatpush1.bf16.msra.mxu0 0
        %491 = vmatprep.subr.bf16.mxu0 0
        %492 = vmatpush1.bf16.msra.mxu0 0
        %493 = vmatprep.subr.bf16.mxu0 0
        %494 = vmatpush1.bf16.msra.mxu0 0
        %495 = vmatprep.subr.bf16.mxu0 0
        %496 = vmatpush1.bf16.msra.mxu0 0
        %497 = vmatprep.subr.bf16.mxu0 0
        %498 = vmatpush1.bf16.msra.mxu0 0
        %499 = vmatprep.subr.bf16.mxu0 0
        %500 = vmatpush1.bf16.msra.mxu0 0
        %501 = vmatprep.subr.bf16.mxu0 0
        %502 = vmatpush1.bf16.msra.mxu0 0
        %503 = vmatprep.subr.bf16.mxu0 0
        %504 = vmatpush1.bf16.msra.mxu0 0
        %505 = vmatprep.subr.bf16.mxu0 0
        %506 = vmatpush1.bf16.msra.mxu0 0
        %507 = vmatprep.subr.bf16.mxu0 0
        %508 = vmatpush1.bf16.msra.mxu0 0
        %509 = vmatprep.subr.bf16.mxu0 0
        %510 = vmatpush1.bf16.msra.mxu0 0
        %511 = vmatprep.subr.bf16.mxu0 0
        %512 = vmatpush1.bf16.msra.mxu0 0
        %513 = vmatprep.mubr.bf16.mxu0 0
        %514 = vmatmul.mubr.bf16.gmra.mrb[0].mxu0 %v479
        %v515 = vpop.f32.mrb[0].mxu0
        %v516 = vadd.f32 %v476, %v515
        %v517 = vpop.f32.mrb[0].mxu0
        %v518 = vpop.f32.mrb[0].mxu0
        %v519 = vpop.f32.mrb[0].mxu0
        %520 = vdwg.mxu0
        %v521 = vld [vmem:[%s352] sm:$0xff]
        %v522 = vpack.c.bf16 %v521, %v521
        %523 = vrot.lane.b32.xlu0 %v419, 64
        %v524 = vpop.permute.xlu0 %523
        %525 = vrot.lane.b32.xlu0 %v420, 64
        %v526 = vpop.permute.xlu0 %525
        %529 = vrot.lane.b32.xlu0 %v409, 64
        %v530 = vpop.permute.xlu0 %529
        %v533 = vsel %vm423, %v522, 0
        %535 = vmatprep.subr.bf16.mxu0 0
        %536 = vmatpush1.bf16.msra.mxu0 %v524
        %537 = vmatprep.subr.bf16.mxu0 0
        %538 = vmatpush1.bf16.msra.mxu0 %v526
        %539 = vmatprep.subr.bf16.mxu0 0
        %540 = vmatpush1.bf16.msra.mxu0 0
        %541 = vmatprep.subr.bf16.mxu0 0
        %542 = vmatpush1.bf16.msra.mxu0 0
        %543 = vmatprep.subr.bf16.mxu0 0
        %544 = vmatpush1.bf16.msra.mxu0 0
        %545 = vmatprep.subr.bf16.mxu0 0
        %546 = vmatpush1.bf16.msra.mxu0 0
        %547 = vmatprep.subr.bf16.mxu0 0
        %548 = vmatpush1.bf16.msra.mxu0 0
        %549 = vmatprep.subr.bf16.mxu0 0
        %550 = vmatpush1.bf16.msra.mxu0 0
        %551 = vmatprep.subr.bf16.mxu0 0
        %552 = vmatpush1.bf16.msra.mxu0 0
        %553 = vmatprep.subr.bf16.mxu0 0
        %554 = vmatpush1.bf16.msra.mxu0 0
        %555 = vmatprep.subr.bf16.mxu0 0
        %556 = vmatpush1.bf16.msra.mxu0 0
        %557 = vmatprep.subr.bf16.mxu0 0
        %558 = vmatpush1.bf16.msra.mxu0 0
        %559 = vmatprep.subr.bf16.mxu0 0
        %560 = vmatpush1.bf16.msra.mxu0 0
        %561 = vmatprep.subr.bf16.mxu0 0
        %562 = vmatpush1.bf16.msra.mxu0 0
        %563 = vmatprep.subr.bf16.mxu0 0
        %564 = vmatpush1.bf16.msra.mxu0 0
        %565 = vmatprep.subr.bf16.mxu0 0
        %566 = vmatpush1.bf16.msra.mxu0 0
        %567 = vmatprep.mubr.bf16.mxu0 0
        %568 = vmatmul.mubr.bf16.gmra.mrb[0].mxu0 %v533
        %v569 = vpop.f32.mrb[0].mxu0
        %v570 = vadd.f32 %v530, %v569
        %v571 = vpop.f32.mrb[0].mxu0
        %v572 = vpop.f32.mrb[0].mxu0
        %v573 = vpop.f32.mrb[0].mxu0
        %574 = vdwg.mxu0
        %576 = vrot.lane.b32.xlu0 %v462, 120
        %v577 = vpop.permute.xlu0 %576
        %579 = vrot.lane.b32.xlu0 %v462, 112
        %v580 = vpop.permute.xlu0 %579
        %582 = vrot.lane.b32.xlu0 %v462, 104
        %v583 = vpop.permute.xlu0 %582
        %v585 = vcombine.low %v462, %v580
        %v586 = vcombine.high %v462, %v580
        %v588 = vunpack.c.l.s4 1983009808
        %v589 = vunpack.c.0.s8 %v588
        %v590 = vlaneseq
        %v591 = vshrl.u32 %v590, 7
        %v592 = vsub.s32 %v589, %v591
        %v593 = vrot.slane %v585, %v592
        %v595 = vunpack.c.l.s4 1983009808
        %v596 = vunpack.c.0.s8 %v595
        %v597 = vlaneseq
        %v598 = vshrl.u32 %v597, 7
        %v599 = vsub.s32 %v596, %v598
        %v600 = vrot.slane %v586, %v599
        %v601 = vcombine.low %v577, %v583
        %v602 = vcombine.high %v577, %v583
        %v604 = vunpack.c.l.s4 1983009808
        %v605 = vunpack.c.0.s8 %v604
        %v606 = vlaneseq
        %v607 = vshrl.u32 %v606, 7
        %v608 = vsub.s32 %v605, %v607
        %v609 = vrot.slane %v601, %v608
        %v611 = vunpack.c.l.s4 1983009808
        %v612 = vunpack.c.0.s8 %v611
        %v613 = vlaneseq
        %v614 = vshrl.u32 %v613, 7
        %v615 = vsub.s32 %v612, %v614
        %v616 = vrot.slane %v602, %v615
        %v617 = vcombine.low %v593, %v609
        %v618 = vcombine.high %v593, %v609
        %v620 = vunpack.c.l.s4 1934713408
        %v621 = vunpack.c.0.s8 %v620
        %v622 = vlaneseq
        %v623 = vshrl.u32 %v622, 7
        %v624 = vsub.s32 %v621, %v623
        %v625 = vrot.slane %v617, %v624
        %v627 = vunpack.c.l.s4 1934713408
        %v628 = vunpack.c.0.s8 %v627
        %v629 = vlaneseq
        %v630 = vshrl.u32 %v629, 7
        %v631 = vsub.s32 %v628, %v630
        %v632 = vrot.slane %v618, %v631
        %v633 = vcombine.low %v600, %v616
        %v634 = vcombine.high %v600, %v616
        %v636 = vunpack.c.l.s4 1934713408
        %v637 = vunpack.c.0.s8 %v636
        %v638 = vlaneseq
        %v639 = vshrl.u32 %v638, 7
        %v640 = vsub.s32 %v637, %v639
        %v641 = vrot.slane %v633, %v640
        %v643 = vunpack.c.l.s4 1934713408
        %v644 = vunpack.c.0.s8 %v643
        %v645 = vlaneseq
        %v646 = vshrl.u32 %v645, 7
        %v647 = vsub.s32 %v644, %v646
        %v648 = vrot.slane %v634, %v647
        %v649 = vcombine.high %v625, 0.0
        %v650 = vcombine.high %v632, 0.0
        %v651 = vcombine.high %v641, 0.0
        %v652 = vcombine.high %v648, 0.0
        %v653 = vcombine.low %v625, %v632
        %v655 = vunpack.c.l.s4 1983009808
        %v656 = vunpack.c.0.s8 %v655
        %v657 = vlaneseq
        %v658 = vshrl.u32 %v657, 7
        %v659 = vsub.s32 %v656, %v658
        %v660 = vrot.slane %v653, %v659
        %v661 = vcombine.low %v649, %v650
        %v663 = vunpack.c.l.s4 1983009808
        %v664 = vunpack.c.0.s8 %v663
        %v665 = vlaneseq
        %v666 = vshrl.u32 %v665, 7
        %v667 = vsub.s32 %v664, %v666
        %v668 = vrot.slane %v661, %v667
        %v669 = vcombine.low %v641, %v648
        %v671 = vunpack.c.l.s4 1983009808
        %v672 = vunpack.c.0.s8 %v671
        %v673 = vlaneseq
        %v674 = vshrl.u32 %v673, 7
        %v675 = vsub.s32 %v672, %v674
        %v676 = vrot.slane %v669, %v675
        %v677 = vcombine.low %v651, %v652
        %v679 = vunpack.c.l.s4 1983009808
        %v680 = vunpack.c.0.s8 %v679
        %v681 = vlaneseq
        %v682 = vshrl.u32 %v681, 7
        %v683 = vsub.s32 %v680, %v682
        %v684 = vrot.slane %v677, %v683
        %v685 = vcombine.low %v660, %v668
        %v686 = vcombine.high %v660, %v668
        %v688 = vunpack.c.l.s4 1934713408
        %v689 = vunpack.c.0.s8 %v688
        %v690 = vlaneseq
        %v691 = vshrl.u32 %v690, 7
        %v692 = vsub.s32 %v689, %v691
        %v693 = vrot.slane %v685, %v692
        %v695 = vunpack.c.l.s4 1934713408
        %v696 = vunpack.c.0.s8 %v695
        %v697 = vlaneseq
        %v698 = vshrl.u32 %v697, 7
        %v699 = vsub.s32 %v696, %v698
        %v700 = vrot.slane %v686, %v699
        %v701 = vcombine.low %v676, %v684
        %v702 = vcombine.high %v676, %v684
        %v704 = vunpack.c.l.s4 1934713408
        %v705 = vunpack.c.0.s8 %v704
        %v706 = vlaneseq
        %v707 = vshrl.u32 %v706, 7
        %v708 = vsub.s32 %v705, %v707
        %v709 = vrot.slane %v701, %v708
        %v711 = vunpack.c.l.s4 1934713408
        %v712 = vunpack.c.0.s8 %v711
        %v713 = vlaneseq
        %v714 = vshrl.u32 %v713, 7
        %v715 = vsub.s32 %v712, %v714
        %v716 = vrot.slane %v702, %v715
        %v717 = vcombine.low %v693, %v709
        %v718 = vcombine.high %v693, %v709
        %v719 = vcombine.low %v700, %v716
        %v720 = vcombine.high %v700, %v716
        %v721 = vpack.c.bf16 %v717, %v717
        %v722 = vpack.c.bf16 %v718, %v718
        %v723 = vpack.c.bf16 %v719, %v719
        %v724 = vpack.c.bf16 %v720, %v720
        %726 = vrot.lane.b32.xlu0 %v516, 120
        %v727 = vpop.permute.xlu0 %726
        %729 = vrot.lane.b32.xlu0 %v516, 112
        %v730 = vpop.permute.xlu0 %729
        %732 = vrot.lane.b32.xlu0 %v516, 104
        %v733 = vpop.permute.xlu0 %732
        %v735 = vcombine.low %v516, %v730
        %v736 = vcombine.high %v516, %v730
        %v738 = vunpack.c.l.s4 1983009808
        %v739 = vunpack.c.0.s8 %v738
        %v740 = vlaneseq
        %v741 = vshrl.u32 %v740, 7
        %v742 = vsub.s32 %v739, %v741
        %v743 = vrot.slane %v735, %v742
        %v745 = vunpack.c.l.s4 1983009808
        %v746 = vunpack.c.0.s8 %v745
        %v747 = vlaneseq
        %v748 = vshrl.u32 %v747, 7
        %v749 = vsub.s32 %v746, %v748
        %v750 = vrot.slane %v736, %v749
        %v751 = vcombine.low %v727, %v733
        %v752 = vcombine.high %v727, %v733
        %v754 = vunpack.c.l.s4 1983009808
        %v755 = vunpack.c.0.s8 %v754
        %v756 = vlaneseq
        %v757 = vshrl.u32 %v756, 7
        %v758 = vsub.s32 %v755, %v757
        %v759 = vrot.slane %v751, %v758
        %v761 = vunpack.c.l.s4 1983009808
        %v762 = vunpack.c.0.s8 %v761
        %v763 = vlaneseq
        %v764 = vshrl.u32 %v763, 7
        %v765 = vsub.s32 %v762, %v764
        %v766 = vrot.slane %v752, %v765
        %v767 = vcombine.low %v743, %v759
        %v768 = vcombine.high %v743, %v759
        %v770 = vunpack.c.l.s4 1934713408
        %v771 = vunpack.c.0.s8 %v770
        %v772 = vlaneseq
        %v773 = vshrl.u32 %v772, 7
        %v774 = vsub.s32 %v771, %v773
        %v775 = vrot.slane %v767, %v774
        %v777 = vunpack.c.l.s4 1934713408
        %v778 = vunpack.c.0.s8 %v777
        %v779 = vlaneseq
        %v780 = vshrl.u32 %v779, 7
        %v781 = vsub.s32 %v778, %v780
        %v782 = vrot.slane %v768, %v781
        %v783 = vcombine.low %v750, %v766
        %v784 = vcombine.high %v750, %v766
        %v786 = vunpack.c.l.s4 1934713408
        %v787 = vunpack.c.0.s8 %v786
        %v788 = vlaneseq
        %v789 = vshrl.u32 %v788, 7
        %v790 = vsub.s32 %v787, %v789
        %v791 = vrot.slane %v783, %v790
        %v793 = vunpack.c.l.s4 1934713408
        %v794 = vunpack.c.0.s8 %v793
        %v795 = vlaneseq
        %v796 = vshrl.u32 %v795, 7
        %v797 = vsub.s32 %v794, %v796
        %v798 = vrot.slane %v784, %v797
        %v799 = vcombine.high %v775, 0.0
        %v800 = vcombine.high %v782, 0.0
        %v801 = vcombine.high %v791, 0.0
        %v802 = vcombine.high %v798, 0.0
        %v803 = vcombine.low %v775, %v782
        %v805 = vunpack.c.l.s4 1983009808
        %v806 = vunpack.c.0.s8 %v805
        %v807 = vlaneseq
        %v808 = vshrl.u32 %v807, 7
        %v809 = vsub.s32 %v806, %v808
        %v810 = vrot.slane %v803, %v809
        %v811 = vcombine.low %v799, %v800
        %v813 = vunpack.c.l.s4 1983009808
        %v814 = vunpack.c.0.s8 %v813
        %v815 = vlaneseq
        %v816 = vshrl.u32 %v815, 7
        %v817 = vsub.s32 %v814, %v816
        %v818 = vrot.slane %v811, %v817
        %v819 = vcombine.low %v791, %v798
        %v821 = vunpack.c.l.s4 1983009808
        %v822 = vunpack.c.0.s8 %v821
        %v823 = vlaneseq
        %v824 = vshrl.u32 %v823, 7
        %v825 = vsub.s32 %v822, %v824
        %v826 = vrot.slane %v819, %v825
        %v827 = vcombine.low %v801, %v802
        %v829 = vunpack.c.l.s4 1983009808
        %v830 = vunpack.c.0.s8 %v829
        %v831 = vlaneseq
        %v832 = vshrl.u32 %v831, 7
        %v833 = vsub.s32 %v830, %v832
        %v834 = vrot.slane %v827, %v833
        %v835 = vcombine.low %v810, %v818
        %v836 = vcombine.high %v810, %v818
        %v838 = vunpack.c.l.s4 1934713408
        %v839 = vunpack.c.0.s8 %v838
        %v840 = vlaneseq
        %v841 = vshrl.u32 %v840, 7
        %v842 = vsub.s32 %v839, %v841
        %v843 = vrot.slane %v835, %v842
        %v845 = vunpack.c.l.s4 1934713408
        %v846 = vunpack.c.0.s8 %v845
        %v847 = vlaneseq
        %v848 = vshrl.u32 %v847, 7
        %v849 = vsub.s32 %v846, %v848
        %v850 = vrot.slane %v836, %v849
        %v851 = vcombine.low %v826, %v834
        %v852 = vcombine.high %v826, %v834
        %v854 = vunpack.c.l.s4 1934713408
        %v855 = vunpack.c.0.s8 %v854
        %v856 = vlaneseq
        %v857 = vshrl.u32 %v856, 7
        %v858 = vsub.s32 %v855, %v857
        %v859 = vrot.slane %v851, %v858
        %v861 = vunpack.c.l.s4 1934713408
        %v862 = vunpack.c.0.s8 %v861
        %v863 = vlaneseq
        %v864 = vshrl.u32 %v863, 7
        %v865 = vsub.s32 %v862, %v864
        %v866 = vrot.slane %v852, %v865
        %v867 = vcombine.low %v843, %v859
        %v868 = vcombine.high %v843, %v859
        %v869 = vcombine.low %v850, %v866
        %v870 = vcombine.high %v850, %v866
        %v871 = vpack.c.bf16 %v867, %v867
        %v872 = vpack.c.bf16 %v868, %v868
        %v873 = vpack.c.bf16 %v869, %v869
        %v874 = vpack.c.bf16 %v870, %v870
        %876 = vrot.lane.b32.xlu0 %v570, 120
        %v877 = vpop.permute.xlu0 %876
        %879 = vrot.lane.b32.xlu0 %v570, 112
        %v880 = vpop.permute.xlu0 %879
        %882 = vrot.lane.b32.xlu0 %v570, 104
        %v883 = vpop.permute.xlu0 %882
        %v885 = vcombine.low %v570, %v880
        %v886 = vcombine.high %v570, %v880
        %v888 = vunpack.c.l.s4 1983009808
        %v889 = vunpack.c.0.s8 %v888
        %v890 = vlaneseq
        %v891 = vshrl.u32 %v890, 7
        %v892 = vsub.s32 %v889, %v891
        %v893 = vrot.slane %v885, %v892
        %v895 = vunpack.c.l.s4 1983009808
        %v896 = vunpack.c.0.s8 %v895
        %v897 = vlaneseq
        %v898 = vshrl.u32 %v897, 7
        %v899 = vsub.s32 %v896, %v898
        %v900 = vrot.slane %v886, %v899
        %v901 = vcombine.low %v877, %v883
        %v902 = vcombine.high %v877, %v883
        %v904 = vunpack.c.l.s4 1983009808
        %v905 = vunpack.c.0.s8 %v904
        %v906 = vlaneseq
        %v907 = vshrl.u32 %v906, 7
        %v908 = vsub.s32 %v905, %v907
        %v909 = vrot.slane %v901, %v908
        %v911 = vunpack.c.l.s4 1983009808
        %v912 = vunpack.c.0.s8 %v911
        %v913 = vlaneseq
        %v914 = vshrl.u32 %v913, 7
        %v915 = vsub.s32 %v912, %v914
        %v916 = vrot.slane %v902, %v915
        %v917 = vcombine.low %v893, %v909
        %v918 = vcombine.high %v893, %v909
        %v920 = vunpack.c.l.s4 1934713408
        %v921 = vunpack.c.0.s8 %v920
        %v922 = vlaneseq
        %v923 = vshrl.u32 %v922, 7
        %v924 = vsub.s32 %v921, %v923
        %v925 = vrot.slane %v917, %v924
        %v927 = vunpack.c.l.s4 1934713408
        %v928 = vunpack.c.0.s8 %v927
        %v929 = vlaneseq
        %v930 = vshrl.u32 %v929, 7
        %v931 = vsub.s32 %v928, %v930
        %v932 = vrot.slane %v918, %v931
        %v933 = vcombine.low %v900, %v916
        %v934 = vcombine.high %v900, %v916
        %v936 = vunpack.c.l.s4 1934713408
        %v937 = vunpack.c.0.s8 %v936
        %v938 = vlaneseq
        %v939 = vshrl.u32 %v938, 7
        %v940 = vsub.s32 %v937, %v939
        %v941 = vrot.slane %v933, %v940
        %v943 = vunpack.c.l.s4 1934713408
        %v944 = vunpack.c.0.s8 %v943
        %v945 = vlaneseq
        %v946 = vshrl.u32 %v945, 7
        %v947 = vsub.s32 %v944, %v946
        %v948 = vrot.slane %v934, %v947
        %v949 = vcombine.high %v925, 0.0
        %v950 = vcombine.high %v932, 0.0
        %v951 = vcombine.high %v941, 0.0
        %v952 = vcombine.high %v948, 0.0
        %v953 = vcombine.low %v925, %v932
        %v955 = vunpack.c.l.s4 1983009808
        %v956 = vunpack.c.0.s8 %v955
        %v957 = vlaneseq
        %v958 = vshrl.u32 %v957, 7
        %v959 = vsub.s32 %v956, %v958
        %v960 = vrot.slane %v953, %v959
        %v961 = vcombine.low %v949, %v950
        %v963 = vunpack.c.l.s4 1983009808
        %v964 = vunpack.c.0.s8 %v963
        %v965 = vlaneseq
        %v966 = vshrl.u32 %v965, 7
        %v967 = vsub.s32 %v964, %v966
        %v968 = vrot.slane %v961, %v967
        %v969 = vcombine.low %v941, %v948
        %v971 = vunpack.c.l.s4 1983009808
        %v972 = vunpack.c.0.s8 %v971
        %v973 = vlaneseq
        %v974 = vshrl.u32 %v973, 7
        %v975 = vsub.s32 %v972, %v974
        %v976 = vrot.slane %v969, %v975
        %v977 = vcombine.low %v951, %v952
        %v979 = vunpack.c.l.s4 1983009808
        %v980 = vunpack.c.0.s8 %v979
        %v981 = vlaneseq
        %v982 = vshrl.u32 %v981, 7
        %v983 = vsub.s32 %v980, %v982
        %v984 = vrot.slane %v977, %v983
        %v985 = vcombine.low %v960, %v968
        %v986 = vcombine.high %v960, %v968
        %v988 = vunpack.c.l.s4 1934713408
        %v989 = vunpack.c.0.s8 %v988
        %v990 = vlaneseq
        %v991 = vshrl.u32 %v990, 7
        %v992 = vsub.s32 %v989, %v991
        %v993 = vrot.slane %v985, %v992
        %v995 = vunpack.c.l.s4 1934713408
        %v996 = vunpack.c.0.s8 %v995
        %v997 = vlaneseq
        %v998 = vshrl.u32 %v997, 7
        %v999 = vsub.s32 %v996, %v998
        %v1000 = vrot.slane %v986, %v999
        %v1001 = vcombine.low %v976, %v984
        %v1002 = vcombine.high %v976, %v984
        %v1004 = vunpack.c.l.s4 1934713408
        %v1005 = vunpack.c.0.s8 %v1004
        %v1006 = vlaneseq
        %v1007 = vshrl.u32 %v1006, 7
        %v1008 = vsub.s32 %v1005, %v1007
        %v1009 = vrot.slane %v1001, %v1008
        %v1011 = vunpack.c.l.s4 1934713408
        %v1012 = vunpack.c.0.s8 %v1011
        %v1013 = vlaneseq
        %v1014 = vshrl.u32 %v1013, 7
        %v1015 = vsub.s32 %v1012, %v1014
        %v1016 = vrot.slane %v1002, %v1015
        %v1017 = vcombine.low %v993, %v1009
        %v1018 = vcombine.high %v993, %v1009
        %v1019 = vcombine.low %v1000, %v1016
        %v1020 = vcombine.high %v1000, %v1016
        %v1021 = vpack.c.bf16 %v1017, %v1017
        %v1022 = vpack.c.bf16 %v1018, %v1018
        %v1023 = vpack.c.bf16 %v1019, %v1019
        %v1024 = vpack.c.bf16 %v1020, %v1020
        %vm1025 = vcmask 64512
        %v1027 = vsel %vm1025, %v721, 0
        %v1030 = vsel %vm1025, %v871, 0
        %1032 = vmatprep.subr.bf16.mxu0 0
        %1033 = vmatpush1.bf16.xpose.msra.mxu0 %v1030
        %1034 = vmatprep.subr.bf16.mxu0 0
        %1035 = vmatpush1.bf16.xpose.msra.mxu0 0
        %1036 = vmatprep.subr.bf16.mxu0 0
        %1037 = vmatpush1.bf16.xpose.msra.mxu0 0
        %1038 = vmatprep.subr.bf16.mxu0 0
        %1039 = vmatpush1.bf16.xpose.msra.mxu0 0
        %1040 = vmatprep.subr.bf16.mxu0 0
        %1041 = vmatpush1.bf16.xpose.msra.mxu0 0
        %1042 = vmatprep.subr.bf16.mxu0 0
        %1043 = vmatpush1.bf16.xpose.msra.mxu0 0
        %1044 = vmatprep.subr.bf16.mxu0 0
        %1045 = vmatpush1.bf16.xpose.msra.mxu0 0
        %1046 = vmatprep.subr.bf16.mxu0 0
        %1047 = vmatpush1.bf16.xpose.msra.mxu0 0
        %1048 = vmatprep.subr.bf16.mxu0 0
        %1049 = vmatpush1.bf16.xpose.msra.mxu0 0
        %1050 = vmatprep.subr.bf16.mxu0 0
        %1051 = vmatpush1.bf16.xpose.msra.mxu0 0
        %1052 = vmatprep.subr.bf16.mxu0 0
        %1053 = vmatpush1.bf16.xpose.msra.mxu0 0
        %1054 = vmatprep.subr.bf16.mxu0 0
        %1055 = vmatpush1.bf16.xpose.msra.mxu0 0
        %1056 = vmatprep.subr.bf16.mxu0 0
        %1057 = vmatpush1.bf16.xpose.msra.mxu0 0
        %1058 = vmatprep.subr.bf16.mxu0 0
        %1059 = vmatpush1.bf16.xpose.msra.mxu0 0
        %1060 = vmatprep.subr.bf16.mxu0 0
        %1061 = vmatpush1.bf16.xpose.msra.mxu0 0
        %1062 = vmatprep.subr.bf16.mxu0 0
        %1063 = vmatpush1.bf16.xpose.msra.mxu0 0
        %1064 = vmatprep.mubr.bf16.mxu0 0
        %1065 = vmatmul.mubr.bf16.gmra.mrb[0].mxu0 %v1027
        %v1066 = vpop.f32.mrb[0].mxu0
        %v1067 = vadd.f32 0.0, %v1066
        %v1068 = vpop.f32.mrb[0].mxu0
        %v1069 = vpop.f32.mrb[0].mxu0
        %v1070 = vpop.f32.mrb[0].mxu0
        %1071 = vdwg.mxu0
        %v1073 = vsel %vm1025, %v722, 0
        %v1076 = vsel %vm1025, %v872, 0
        %1078 = vmatprep.subr.bf16.mxu0 0
        %1079 = vmatpush1.bf16.xpose.msra.mxu0 %v1076
        %1080 = vmatprep.subr.bf16.mxu0 0
        %1081 = vmatpush1.bf16.xpose.msra.mxu0 0
        %1082 = vmatprep.subr.bf16.mxu0 0
        %1083 = vmatpush1.bf16.xpose.msra.mxu0 0
        %1084 = vmatprep.subr.bf16.mxu0 0
        %1085 = vmatpush1.bf16.xpose.msra.mxu0 0
        %1086 = vmatprep.subr.bf16.mxu0 0
        %1087 = vmatpush1.bf16.xpose.msra.mxu0 0
        %1088 = vmatprep.subr.bf16.mxu0 0
        %1089 = vmatpush1.bf16.xpose.msra.mxu0 0
        %1090 = vmatprep.subr.bf16.mxu0 0
        %1091 = vmatpush1.bf16.xpose.msra.mxu0 0
        %1092 = vmatprep.subr.bf16.mxu0 0
        %1093 = vmatpush1.bf16.xpose.msra.mxu0 0
        %1094 = vmatprep.subr.bf16.mxu0 0
        %1095 = vmatpush1.bf16.xpose.msra.mxu0 0
        %1096 = vmatprep.subr.bf16.mxu0 0
        %1097 = vmatpush1.bf16.xpose.msra.mxu0 0
        %1098 = vmatprep.subr.bf16.mxu0 0
        %1099 = vmatpush1.bf16.xpose.msra.mxu0 0
        %1100 = vmatprep.subr.bf16.mxu0 0
        %1101 = vmatpush1.bf16.xpose.msra.mxu0 0
        %1102 = vmatprep.subr.bf16.mxu0 0
        %1103 = vmatpush1.bf16.xpose.msra.mxu0 0
        %1104 = vmatprep.subr.bf16.mxu0 0
        %1105 = vmatpush1.bf16.xpose.msra.mxu0 0
        %1106 = vmatprep.subr.bf16.mxu0 0
        %1107 = vmatpush1.bf16.xpose.msra.mxu0 0
        %1108 = vmatprep.subr.bf16.mxu0 0
        %1109 = vmatpush1.bf16.xpose.msra.mxu0 0
        %1110 = vmatprep.mubr.bf16.mxu0 0
        %1111 = vmatmul.mubr.bf16.gmra.mrb[0].mxu0 %v1073
        %v1112 = vpop.f32.mrb[0].mxu0
        %v1113 = vadd.f32 0.0, %v1112
        %v1114 = vpop.f32.mrb[0].mxu0
        %v1115 = vpop.f32.mrb[0].mxu0
        %v1116 = vpop.f32.mrb[0].mxu0
        %1117 = vdwg.mxu0
        %v1119 = vsel %vm1025, %v723, 0
        %v1122 = vsel %vm1025, %v873, 0
        %1124 = vmatprep.subr.bf16.mxu0 0
        %1125 = vmatpush1.bf16.xpose.msra.mxu0 %v1122
        %1126 = vmatprep.subr.bf16.mxu0 0
        %1127 = vmatpush1.bf16.xpose.msra.mxu0 0
        %1128 = vmatprep.subr.bf16.mxu0 0
        %1129 = vmatpush1.bf16.xpose.msra.mxu0 0
        %1130 = vmatprep.subr.bf16.mxu0 0
        %1131 = vmatpush1.bf16.xpose.msra.mxu0 0
        %1132 = vmatprep.subr.bf16.mxu0 0
        %1133 = vmatpush1.bf16.xpose.msra.mxu0 0
        %1134 = vmatprep.subr.bf16.mxu0 0
        %1135 = vmatpush1.bf16.xpose.msra.mxu0 0
        %1136 = vmatprep.subr.bf16.mxu0 0
        %1137 = vmatpush1.bf16.xpose.msra.mxu0 0
        %1138 = vmatprep.subr.bf16.mxu0 0
        %1139 = vmatpush1.bf16.xpose.msra.mxu0 0
        %1140 = vmatprep.subr.bf16.mxu0 0
        %1141 = vmatpush1.bf16.xpose.msra.mxu0 0
        %1142 = vmatprep.subr.bf16.mxu0 0
        %1143 = vmatpush1.bf16.xpose.msra.mxu0 0
        %1144 = vmatprep.subr.bf16.mxu0 0
        %1145 = vmatpush1.bf16.xpose.msra.mxu0 0
        %1146 = vmatprep.subr.bf16.mxu0 0
        %1147 = vmatpush1.bf16.xpose.msra.mxu0 0
        %1148 = vmatprep.subr.bf16.mxu0 0
        %1149 = vmatpush1.bf16.xpose.msra.mxu0 0
        %1150 = vmatprep.subr.bf16.mxu0 0
        %1151 = vmatpush1.bf16.xpose.msra.mxu0 0
        %1152 = vmatprep.subr.bf16.mxu0 0
        %1153 = vmatpush1.bf16.xpose.msra.mxu0 0
        %1154 = vmatprep.subr.bf16.mxu0 0
        %1155 = vmatpush1.bf16.xpose.msra.mxu0 0
        %1156 = vmatprep.mubr.bf16.mxu0 0
        %1157 = vmatmul.mubr.bf16.gmra.mrb[0].mxu0 %v1119
        %v1158 = vpop.f32.mrb[0].mxu0
        %v1159 = vadd.f32 0.0, %v1158
        %v1160 = vpop.f32.mrb[0].mxu0
        %v1161 = vpop.f32.mrb[0].mxu0
        %v1162 = vpop.f32.mrb[0].mxu0
        %1163 = vdwg.mxu0
        %v1165 = vsel %vm1025, %v724, 0
        %v1168 = vsel %vm1025, %v874, 0
        %1170 = vmatprep.subr.bf16.mxu0 0
        %1171 = vmatpush1.bf16.xpose.msra.mxu0 %v1168
        %1172 = vmatprep.subr.bf16.mxu0 0
        %1173 = vmatpush1.bf16.xpose.msra.mxu0 0
        %1174 = vmatprep.subr.bf16.mxu0 0
        %1175 = vmatpush1.bf16.xpose.msra.mxu0 0
        %1176 = vmatprep.subr.bf16.mxu0 0
        %1177 = vmatpush1.bf16.xpose.msra.mxu0 0
        %1178 = vmatprep.subr.bf16.mxu0 0
        %1179 = vmatpush1.bf16.xpose.msra.mxu0 0
        %1180 = vmatprep.subr.bf16.mxu0 0
        %1181 = vmatpush1.bf16.xpose.msra.mxu0 0
        %1182 = vmatprep.subr.bf16.mxu0 0
        %1183 = vmatpush1.bf16.xpose.msra.mxu0 0
        %1184 = vmatprep.subr.bf16.mxu0 0
        %1185 = vmatpush1.bf16.xpose.msra.mxu0 0
        %1186 = vmatprep.subr.bf16.mxu0 0
        %1187 = vmatpush1.bf16.xpose.msra.mxu0 0
        %1188 = vmatprep.subr.bf16.mxu0 0
        %1189 = vmatpush1.bf16.xpose.msra.mxu0 0
        %1190 = vmatprep.subr.bf16.mxu0 0
        %1191 = vmatpush1.bf16.xpose.msra.mxu0 0
        %1192 = vmatprep.subr.bf16.mxu0 0
        %1193 = vmatpush1.bf16.xpose.msra.mxu0 0
        %1194 = vmatprep.subr.bf16.mxu0 0
        %1195 = vmatpush1.bf16.xpose.msra.mxu0 0
        %1196 = vmatprep.subr.bf16.mxu0 0
        %1197 = vmatpush1.bf16.xpose.msra.mxu0 0
        %1198 = vmatprep.subr.bf16.mxu0 0
        %1199 = vmatpush1.bf16.xpose.msra.mxu0 0
        %1200 = vmatprep.subr.bf16.mxu0 0
        %1201 = vmatpush1.bf16.xpose.msra.mxu0 0
        %1202 = vmatprep.mubr.bf16.mxu0 0
        %1203 = vmatmul.mubr.bf16.gmra.mrb[0].mxu0 %v1165
        %v1204 = vpop.f32.mrb[0].mxu0
        %v1205 = vadd.f32 0.0, %v1204
        %v1206 = vpop.f32.mrb[0].mxu0
        %v1207 = vpop.f32.mrb[0].mxu0
        %v1208 = vpop.f32.mrb[0].mxu0
        %1209 = vdwg.mxu0
        %v1210 = vsel %vm1025, %v1067, -inf
        %1211 = vmax.xlane.f32.xlu0 %v1210
        %v1212 = vpop.xlane.xlu0 %1211
        %v1213 = vsel %vm1025, %v1113, -inf
        %1214 = vmax.xlane.f32.xlu0 %v1213
        %v1215 = vpop.xlane.xlu0 %1214
        %v1216 = vsel %vm1025, %v1159, -inf
        %1217 = vmax.xlane.f32.xlu0 %v1216
        %v1218 = vpop.xlane.xlu0 %1217
        %v1219 = vsel %vm1025, %v1205, -inf
        %1220 = vmax.xlane.f32.xlu0 %v1219
        %v1221 = vpop.xlane.xlu0 %1220
        %v1222 = vsub.f32 %v1067, %v1212
        %v1223 = vsub.f32 %v1113, %v1215
        %v1224 = vsub.f32 %v1159, %v1218
        %v1225 = vsub.f32 %v1205, %v1221
        %v1226 = vmul.f32 %v1222, 1.442695
        %v1227 = vpow.pop %v1226
        %v1228 = vmul.f32 %v1223, 1.442695
        %v1229 = vpow.pop %v1228
        %v1230 = vmul.f32 %v1224, 1.442695
        %v1231 = vpow.pop %v1230
        %v1232 = vmul.f32 %v1225, 1.442695
        %v1233 = vpow.pop %v1232
        %v1234 = vsel %vm1025, %v1227, 0.0
        %1235 = vadd.xlane.f32.xlu0 %v1234
        %v1236 = vpop.xlane.xlu0 %1235
        %v1237 = vsel %vm1025, %v1229, 0.0
        %1238 = vadd.xlane.f32.xlu0 %v1237
        %v1239 = vpop.xlane.xlu0 %1238
        %v1240 = vsel %vm1025, %v1231, 0.0
        %1241 = vadd.xlane.f32.xlu0 %v1240
        %v1242 = vpop.xlane.xlu0 %1241
        %v1243 = vsel %vm1025, %v1233, 0.0
        %1244 = vadd.xlane.f32.xlu0 %v1243
        %v1245 = vpop.xlane.xlu0 %1244
        %v1246 = vrcp.pop %v1236
        %v1247 = vmul.f32 %v1227, %v1246
        %v1248 = vrcp.pop %v1239
        %v1249 = vmul.f32 %v1229, %v1248
        %v1250 = vrcp.pop %v1242
        %v1251 = vmul.f32 %v1231, %v1250
        %v1252 = vrcp.pop %v1245
        %v1253 = vmul.f32 %v1233, %v1252
        %v1254 = vpack.c.bf16 %v1247, %v1247
        %v1255 = vpack.c.bf16 %v1249, %v1249
        %v1256 = vpack.c.bf16 %v1251, %v1251
        %v1257 = vpack.c.bf16 %v1253, %v1253
        %v1259 = vsel %vm1025, %v1254, 0
        %vm1261 = vcmask 1043456
        %v1263 = vsel %vm1261, %v1021, 0
        %1265 = vmatprep.subr.bf16.mxu0 0
        %1266 = vmatpush1.bf16.msra.mxu0 %v1263
        %1267 = vmatprep.subr.bf16.mxu0 0
        %1268 = vmatpush1.bf16.msra.mxu0 0
        %1269 = vmatprep.subr.bf16.mxu0 0
        %1270 = vmatpush1.bf16.msra.mxu0 0
        %1271 = vmatprep.subr.bf16.mxu0 0
        %1272 = vmatpush1.bf16.msra.mxu0 0
        %1273 = vmatprep.subr.bf16.mxu0 0
        %1274 = vmatpush1.bf16.msra.mxu0 0
        %1275 = vmatprep.subr.bf16.mxu0 0
        %1276 = vmatpush1.bf16.msra.mxu0 0
        %1277 = vmatprep.subr.bf16.mxu0 0
        %1278 = vmatpush1.bf16.msra.mxu0 0
        %1279 = vmatprep.subr.bf16.mxu0 0
        %1280 = vmatpush1.bf16.msra.mxu0 0
        %1281 = vmatprep.subr.bf16.mxu0 0
        %1282 = vmatpush1.bf16.msra.mxu0 0
        %1283 = vmatprep.subr.bf16.mxu0 0
        %1284 = vmatpush1.bf16.msra.mxu0 0
        %1285 = vmatprep.subr.bf16.mxu0 0
        %1286 = vmatpush1.bf16.msra.mxu0 0
        %1287 = vmatprep.subr.bf16.mxu0 0
        %1288 = vmatpush1.bf16.msra.mxu0 0
        %1289 = vmatprep.subr.bf16.mxu0 0
        %1290 = vmatpush1.bf16.msra.mxu0 0
        %1291 = vmatprep.subr.bf16.mxu0 0
        %1292 = vmatpush1.bf16.msra.mxu0 0
        %1293 = vmatprep.subr.bf16.mxu0 0
        %1294 = vmatpush1.bf16.msra.mxu0 0
        %1295 = vmatprep.subr.bf16.mxu0 0
        %1296 = vmatpush1.bf16.msra.mxu0 0
        %1297 = vmatprep.mubr.bf16.mxu0 0
        %1298 = vmatmul.mubr.bf16.gmra.mrb[0].mxu0 %v1259
        %v1299 = vpop.f32.mrb[0].mxu0
        %v1300 = vadd.f32 0.0, %v1299
        %v1301 = vpop.f32.mrb[0].mxu0
        %v1302 = vpop.f32.mrb[0].mxu0
        %v1303 = vpop.f32.mrb[0].mxu0
        %1304 = vdwg.mxu0
        %v1306 = vsel %vm1025, %v1255, 0
        %v1309 = vsel %vm1261, %v1022, 0
        %1311 = vmatprep.subr.bf16.mxu0 0
        %1312 = vmatpush1.bf16.msra.mxu0 %v1309
        %1313 = vmatprep.subr.bf16.mxu0 0
        %1314 = vmatpush1.bf16.msra.mxu0 0
        %1315 = vmatprep.subr.bf16.mxu0 0
        %1316 = vmatpush1.bf16.msra.mxu0 0
        %1317 = vmatprep.subr.bf16.mxu0 0
        %1318 = vmatpush1.bf16.msra.mxu0 0
        %1319 = vmatprep.subr.bf16.mxu0 0
        %1320 = vmatpush1.bf16.msra.mxu0 0
        %1321 = vmatprep.subr.bf16.mxu0 0
        %1322 = vmatpush1.bf16.msra.mxu0 0
        %1323 = vmatprep.subr.bf16.mxu0 0
        %1324 = vmatpush1.bf16.msra.mxu0 0
        %1325 = vmatprep.subr.bf16.mxu0 0
        %1326 = vmatpush1.bf16.msra.mxu0 0
        %1327 = vmatprep.subr.bf16.mxu0 0
        %1328 = vmatpush1.bf16.msra.mxu0 0
        %1329 = vmatprep.subr.bf16.mxu0 0
        %1330 = vmatpush1.bf16.msra.mxu0 0
        %1331 = vmatprep.subr.bf16.mxu0 0
        %1332 = vmatpush1.bf16.msra.mxu0 0
        %1333 = vmatprep.subr.bf16.mxu0 0
        %1334 = vmatpush1.bf16.msra.mxu0 0
        %1335 = vmatprep.subr.bf16.mxu0 0
        %1336 = vmatpush1.bf16.msra.mxu0 0
        %1337 = vmatprep.subr.bf16.mxu0 0
        %1338 = vmatpush1.bf16.msra.mxu0 0
        %1339 = vmatprep.subr.bf16.mxu0 0
        %1340 = vmatpush1.bf16.msra.mxu0 0
        %1341 = vmatprep.subr.bf16.mxu0 0
        %1342 = vmatpush1.bf16.msra.mxu0 0
        %1343 = vmatprep.mubr.bf16.mxu0 0
        %1344 = vmatmul.mubr.bf16.gmra.mrb[0].mxu0 %v1306
        %v1345 = vpop.f32.mrb[0].mxu0
        %v1346 = vadd.f32 0.0, %v1345
        %v1347 = vpop.f32.mrb[0].mxu0
        %v1348 = vpop.f32.mrb[0].mxu0
        %v1349 = vpop.f32.mrb[0].mxu0
        %1350 = vdwg.mxu0
        %v1352 = vsel %vm1025, %v1256, 0
        %v1355 = vsel %vm1261, %v1023, 0
        %1357 = vmatprep.subr.bf16.mxu0 0
        %1358 = vmatpush1.bf16.msra.mxu0 %v1355
        %1359 = vmatprep.subr.bf16.mxu0 0
        %1360 = vmatpush1.bf16.msra.mxu0 0
        %1361 = vmatprep.subr.bf16.mxu0 0
        %1362 = vmatpush1.bf16.msra.mxu0 0
        %1363 = vmatprep.subr.bf16.mxu0 0
        %1364 = vmatpush1.bf16.msra.mxu0 0
        %1365 = vmatprep.subr.bf16.mxu0 0
        %1366 = vmatpush1.bf16.msra.mxu0 0
        %1367 = vmatprep.subr.bf16.mxu0 0
        %1368 = vmatpush1.bf16.msra.mxu0 0
        %1369 = vmatprep.subr.bf16.mxu0 0
        %1370 = vmatpush1.bf16.msra.mxu0 0
        %1371 = vmatprep.subr.bf16.mxu0 0
        %1372 = vmatpush1.bf16.msra.mxu0 0
        %1373 = vmatprep.subr.bf16.mxu0 0
        %1374 = vmatpush1.bf16.msra.mxu0 0
        %1375 = vmatprep.subr.bf16.mxu0 0
        %1376 = vmatpush1.bf16.msra.mxu0 0
        %1377 = vmatprep.subr.bf16.mxu0 0
        %1378 = vmatpush1.bf16.msra.mxu0 0
        %1379 = vmatprep.subr.bf16.mxu0 0
        %1380 = vmatpush1.bf16.msra.mxu0 0
        %1381 = vmatprep.subr.bf16.mxu0 0
        %1382 = vmatpush1.bf16.msra.mxu0 0
        %1383 = vmatprep.subr.bf16.mxu0 0
        %1384 = vmatpush1.bf16.msra.mxu0 0
        %1385 = vmatprep.subr.bf16.mxu0 0
        %1386 = vmatpush1.bf16.msra.mxu0 0
        %1387 = vmatprep.subr.bf16.mxu0 0
        %1388 = vmatpush1.bf16.msra.mxu0 0
        %1389 = vmatprep.mubr.bf16.mxu0 0
        %1390 = vmatmul.mubr.bf16.gmra.mrb[0].mxu0 %v1352
        %v1391 = vpop.f32.mrb[0].mxu0
        %v1392 = vadd.f32 0.0, %v1391
        %v1393 = vpop.f32.mrb[0].mxu0
        %v1394 = vpop.f32.mrb[0].mxu0
        %v1395 = vpop.f32.mrb[0].mxu0
        %1396 = vdwg.mxu0
        %v1398 = vsel %vm1025, %v1257, 0
        %v1401 = vsel %vm1261, %v1024, 0
        %1403 = vmatprep.subr.bf16.mxu0 0
        %1404 = vmatpush1.bf16.msra.mxu0 %v1401
        %1405 = vmatprep.subr.bf16.mxu0 0
        %1406 = vmatpush1.bf16.msra.mxu0 0
        %1407 = vmatprep.subr.bf16.mxu0 0
        %1408 = vmatpush1.bf16.msra.mxu0 0
        %1409 = vmatprep.subr.bf16.mxu0 0
        %1410 = vmatpush1.bf16.msra.mxu0 0
        %1411 = vmatprep.subr.bf16.mxu0 0
        %1412 = vmatpush1.bf16.msra.mxu0 0
        %1413 = vmatprep.subr.bf16.mxu0 0
        %1414 = vmatpush1.bf16.msra.mxu0 0
        %1415 = vmatprep.subr.bf16.mxu0 0
        %1416 = vmatpush1.bf16.msra.mxu0 0
        %1417 = vmatprep.subr.bf16.mxu0 0
        %1418 = vmatpush1.bf16.msra.mxu0 0
        %1419 = vmatprep.subr.bf16.mxu0 0
        %1420 = vmatpush1.bf16.msra.mxu0 0
        %1421 = vmatprep.subr.bf16.mxu0 0
        %1422 = vmatpush1.bf16.msra.mxu0 0
        %1423 = vmatprep.subr.bf16.mxu0 0
        %1424 = vmatpush1.bf16.msra.mxu0 0
        %1425 = vmatprep.subr.bf16.mxu0 0
        %1426 = vmatpush1.bf16.msra.mxu0 0
        %1427 = vmatprep.subr.bf16.mxu0 0
        %1428 = vmatpush1.bf16.msra.mxu0 0
        %1429 = vmatprep.subr.bf16.mxu0 0
        %1430 = vmatpush1.bf16.msra.mxu0 0
        %1431 = vmatprep.subr.bf16.mxu0 0
        %1432 = vmatpush1.bf16.msra.mxu0 0
        %1433 = vmatprep.subr.bf16.mxu0 0
        %1434 = vmatpush1.bf16.msra.mxu0 0
        %1435 = vmatprep.mubr.bf16.mxu0 0
        %1436 = vmatmul.mubr.bf16.gmra.mrb[0].mxu0 %v1398
        %v1437 = vpop.f32.mrb[0].mxu0
        %v1438 = vadd.f32 0.0, %v1437
        %v1439 = vpop.f32.mrb[0].mxu0
        %v1440 = vpop.f32.mrb[0].mxu0
        %v1441 = vpop.f32.mrb[0].mxu0
        %1442 = vdwg.mxu0
        %v1443 = vcombine.low %v1300, %v1392
        %v1444 = vcombine.high %v1300, %v1392
        %v1446 = vunpack.c.l.s4 1983009808
        %v1447 = vunpack.c.0.s8 %v1446
        %v1448 = vlaneseq
        %v1449 = vshrl.u32 %v1448, 7
        %v1450 = vsub.s32 %v1447, %v1449
        %v1451 = vrot.slane %v1443, %v1450
        %v1453 = vunpack.c.l.s4 1983009808
        %v1454 = vunpack.c.0.s8 %v1453
        %v1455 = vlaneseq
        %v1456 = vshrl.u32 %v1455, 7
        %v1457 = vsub.s32 %v1454, %v1456
        %v1458 = vrot.slane %v1444, %v1457
        %v1459 = vcombine.low %v1346, %v1438
        %v1460 = vcombine.high %v1346, %v1438
        %v1462 = vunpack.c.l.s4 1983009808
        %v1463 = vunpack.c.0.s8 %v1462
        %v1464 = vlaneseq
        %v1465 = vshrl.u32 %v1464, 7
        %v1466 = vsub.s32 %v1463, %v1465
        %v1467 = vrot.slane %v1459, %v1466
        %v1469 = vunpack.c.l.s4 1983009808
        %v1470 = vunpack.c.0.s8 %v1469
        %v1471 = vlaneseq
        %v1472 = vshrl.u32 %v1471, 7
        %v1473 = vsub.s32 %v1470, %v1472
        %v1474 = vrot.slane %v1460, %v1473
        %v1475 = vcombine.low %v1451, %v1467
        %v1476 = vcombine.high %v1451, %v1467
        %v1478 = vunpack.c.l.s4 1934713408
        %v1479 = vunpack.c.0.s8 %v1478
        %v1480 = vlaneseq
        %v1481 = vshrl.u32 %v1480, 7
        %v1482 = vsub.s32 %v1479, %v1481
        %v1483 = vrot.slane %v1475, %v1482
        %v1485 = vunpack.c.l.s4 1934713408
        %v1486 = vunpack.c.0.s8 %v1485
        %v1487 = vlaneseq
        %v1488 = vshrl.u32 %v1487, 7
        %v1489 = vsub.s32 %v1486, %v1488
        %v1490 = vrot.slane %v1476, %v1489
        %v1491 = vcombine.low %v1458, %v1474
        %v1492 = vcombine.high %v1458, %v1474
        %v1494 = vunpack.c.l.s4 1934713408
        %v1495 = vunpack.c.0.s8 %v1494
        %v1496 = vlaneseq
        %v1497 = vshrl.u32 %v1496, 7
        %v1498 = vsub.s32 %v1495, %v1497
        %v1499 = vrot.slane %v1491, %v1498
        %v1501 = vunpack.c.l.s4 1934713408
        %v1502 = vunpack.c.0.s8 %v1501
        %v1503 = vlaneseq
        %v1504 = vshrl.u32 %v1503, 7
        %v1505 = vsub.s32 %v1502, %v1504
        %v1506 = vrot.slane %v1492, %v1505
        %v1507 = vcombine.high %v1483, 0.0
        %v1508 = vcombine.high %v1490, 0.0
        %v1509 = vcombine.high %v1499, 0.0
        %v1510 = vcombine.high %v1506, 0.0
        %v1511 = vcombine.low %v1483, %v1490
        %v1513 = vunpack.c.l.s4 1983009808
        %v1514 = vunpack.c.0.s8 %v1513
        %v1515 = vlaneseq
        %v1516 = vshrl.u32 %v1515, 7
        %v1517 = vsub.s32 %v1514, %v1516
        %v1518 = vrot.slane %v1511, %v1517
        %v1519 = vcombine.low %v1507, %v1508
        %v1521 = vunpack.c.l.s4 1983009808
        %v1522 = vunpack.c.0.s8 %v1521
        %v1523 = vlaneseq
        %v1524 = vshrl.u32 %v1523, 7
        %v1525 = vsub.s32 %v1522, %v1524
        %v1526 = vrot.slane %v1519, %v1525
        %v1527 = vcombine.low %v1499, %v1506
        %v1529 = vunpack.c.l.s4 1983009808
        %v1530 = vunpack.c.0.s8 %v1529
        %v1531 = vlaneseq
        %v1532 = vshrl.u32 %v1531, 7
        %v1533 = vsub.s32 %v1530, %v1532
        %v1534 = vrot.slane %v1527, %v1533
        %v1535 = vcombine.low %v1509, %v1510
        %v1537 = vunpack.c.l.s4 1983009808
        %v1538 = vunpack.c.0.s8 %v1537
        %v1539 = vlaneseq
        %v1540 = vshrl.u32 %v1539, 7
        %v1541 = vsub.s32 %v1538, %v1540
        %v1542 = vrot.slane %v1535, %v1541
        %v1543 = vcombine.low %v1518, %v1526
        %v1544 = vcombine.high %v1518, %v1526
        %v1546 = vunpack.c.l.s4 1934713408
        %v1547 = vunpack.c.0.s8 %v1546
        %v1548 = vlaneseq
        %v1549 = vshrl.u32 %v1548, 7
        %v1550 = vsub.s32 %v1547, %v1549
        %v1551 = vrot.slane %v1543, %v1550
        %v1553 = vunpack.c.l.s4 1934713408
        %v1554 = vunpack.c.0.s8 %v1553
        %v1555 = vlaneseq
        %v1556 = vshrl.u32 %v1555, 7
        %v1557 = vsub.s32 %v1554, %v1556
        %v1558 = vrot.slane %v1544, %v1557
        %v1559 = vcombine.low %v1534, %v1542
        %v1560 = vcombine.high %v1534, %v1542
        %v1562 = vunpack.c.l.s4 1934713408
        %v1563 = vunpack.c.0.s8 %v1562
        %v1564 = vlaneseq
        %v1565 = vshrl.u32 %v1564, 7
        %v1566 = vsub.s32 %v1563, %v1565
        %v1567 = vrot.slane %v1559, %v1566
        %v1569 = vunpack.c.l.s4 1934713408
        %v1570 = vunpack.c.0.s8 %v1569
        %v1571 = vlaneseq
        %v1572 = vshrl.u32 %v1571, 7
        %v1573 = vsub.s32 %v1570, %v1572
        %v1574 = vrot.slane %v1560, %v1573
        %v1575 = vcombine.low %v1551, %v1567
        %v1576 = vcombine.high %v1551, %v1567
        %v1577 = vcombine.low %v1558, %v1574
        %v1578 = vcombine.high %v1558, %v1574
        %1580 = vrot.lane.b32.xlu0 %v1576, 8
        %v1581 = vpop.permute.xlu0 %1580
        %1584 = vrot.lane.b32.xlu0 %v1577, 16
        %v1585 = vpop.permute.xlu0 %1584
        %1588 = vrot.lane.b32.xlu0 %v1578, 24
        %v1589 = vpop.permute.xlu0 %1588
        %v1591 = vsel %vm1025, %v1575, %v1581
        %vm1592 = vcmask 130048
        %v1593 = vsel %vm1592, %v1591, %v1585
        %vm1594 = vcmask 195584
        %v1595 = vsel %vm1594, %v1593, %v1589
        %v1596 = vpack.c.bf16 %v1595, %v1595
        %v1597 = vld [vmem:[%s5] sm:$0xf]
        %v1598 = vld [vmem:[%s5 + $0x4] sm:$0xf]
        %v1599 = vld [vmem:[%s5 + $0x8] sm:$0xf]
        %v1600 = vld [vmem:[%s5 + $0xc] sm:$0xf]
        %v1601 = vld [vmem:[%s6] sm:$0x1]
        %v1603 = vlaneseq
        %v1604 = vshrl.u32 %v1603, 7
        %v1605 = vsub.s32 0, %v1604
        %v1606 = vrot.slane %v1601, %v1605
        %v1612 = vunpack.c.l.b16 %v1597
        %v1613 = vunpack.c.l.b16 %v1598
        %v1614 = vunpack.c.l.b16 %v1599
        %v1615 = vunpack.c.l.b16 %v1600
        %v1616 = vpack.c.b16 %v1613, %v1612
        %v1617 = vpack.c.b16 %v1615, %v1614
        %v1621 = vsel %vm423, %v1596, 0
        %1623 = vmatprep.subr.bf16.mxu0 0
        %1624 = vmatpush1.bf16.msra.mxu0 %v1616
        %1625 = vmatprep.subr.bf16.mxu0 0
        %1626 = vmatpush1.bf16.msra.mxu0 %v1617
        %1627 = vmatprep.subr.bf16.mxu0 0
        %1628 = vmatpush1.bf16.msra.mxu0 0
        %1629 = vmatprep.subr.bf16.mxu0 0
        %1630 = vmatpush1.bf16.msra.mxu0 0
        %1631 = vmatprep.subr.bf16.mxu0 0
        %1632 = vmatpush1.bf16.msra.mxu0 0
        %1633 = vmatprep.subr.bf16.mxu0 0
        %1634 = vmatpush1.bf16.msra.mxu0 0
        %1635 = vmatprep.subr.bf16.mxu0 0
        %1636 = vmatpush1.bf16.msra.mxu0 0
        %1637 = vmatprep.subr.bf16.mxu0 0
        %1638 = vmatpush1.bf16.msra.mxu0 0
        %1639 = vmatprep.subr.bf16.mxu0 0
        %1640 = vmatpush1.bf16.msra.mxu0 0
        %1641 = vmatprep.subr.bf16.mxu0 0
        %1642 = vmatpush1.bf16.msra.mxu0 0
        %1643 = vmatprep.subr.bf16.mxu0 0
        %1644 = vmatpush1.bf16.msra.mxu0 0
        %1645 = vmatprep.subr.bf16.mxu0 0
        %1646 = vmatpush1.bf16.msra.mxu0 0
        %1647 = vmatprep.subr.bf16.mxu0 0
        %1648 = vmatpush1.bf16.msra.mxu0 0
        %1649 = vmatprep.subr.bf16.mxu0 0
        %1650 = vmatpush1.bf16.msra.mxu0 0
        %1651 = vmatprep.subr.bf16.mxu0 0
        %1652 = vmatpush1.bf16.msra.mxu0 0
        %1653 = vmatprep.subr.bf16.mxu0 0
        %1654 = vmatpush1.bf16.msra.mxu0 0
        %1655 = vmatprep.mubr.bf16.mxu0 0
        %1656 = vmatmul.mubr.bf16.gmra.mrb[0].mxu0 %v1621
        %v1657 = vpop.f32.mrb[0].mxu0
        %v1658 = vadd.f32 %v1606, %v1657
        %v1659 = vpop.f32.mrb[0].mxu0
        %v1660 = vpop.f32.mrb[0].mxu0
        %v1661 = vpop.f32.mrb[0].mxu0
        %1662 = vdwg.mxu0
        %1663 = vst.msk [vmem:[%s396] sm:$0xff] %vm423, %v1658
        %s1664 = sand.u32 %s214, 1
        %s1665 = scalar_lea.sflag [#allocation4], %s1664
        %s1666 = sand.u32 %s214, 1
        %s1667 = smul.addr %s1666, 8
        %s1668 = scalar_lea.vmem [#allocation10], %s1667
        // Predicated region
        $region65: #{tpu_custom_call.1} parent=47 // pred_check
          %p1669 = pneg %p224
        $region66: #{tpu_custom_call.1} parent=47 // pred_check_branch
          %1671 = sbr.rel (%p1669) target = $region68
        $region67: #{tpu_custom_call.1} parent=47 // pred_region
          %s1673 = ssub.s32 128, 128
          %1674 = vsyncadd %s1665, %s1673
          %s1675 = sadd.s32 %s33, %s32
          %s1676 = smul.addr %s1675, 128
          %s1677 = scalar_lea.hbm %s7, %s1676
          %s1679 = sshll.u32 %s1668, 4
          %s1680 = int_to_ptr.vmem [resolvable:$true] %s1679
          %1682 = dma.vmem_to_hbm [thread:$0]  %s1680, 128, %s1677, %s1665
        $region68: #{tpu_custom_call.1} parent=47 // pred_fallthru
          _
      $region48: #{tpu_custom_call.1} parent=5 // pred_fallthru
        _
      %p1683 = scmp.le.s32.totalorder 2, %s23
      // Predicated region
      $region69: #{tpu_custom_call.1} parent=5 // pred_check
        %p1684 = pneg %p1683
      $region70: #{tpu_custom_call.1} parent=5 // pred_check_branch
        %1686 = sbr.rel (%p1684) target = $region72
      $region71: #{tpu_custom_call.1} parent=5 // pred_region
        %s1687 = ssub.s32 %s23, 2
        // Predicated region
        $region73: #{tpu_custom_call.1} parent=71 // pred_check
          %p1688 = pneg %p230
        $region74: #{tpu_custom_call.1} parent=71 // pred_check_branch
          %1690 = sbr.rel (%p1688) target = $region76
        $region75: #{tpu_custom_call.1} parent=71 // pred_region
          %s1691 = sand.u32 %s215, 1
          %s1692 = scalar_lea.sflag [#allocation4], %s1691
          %s1693 = sand.u32 %s215, 1
          %s1694 = smul.addr %s1693, 8
          %s1695 = scalar_lea.vmem [#allocation10], %s1694
          %1696 = dma.done %s1692, 128
        $region76: #{tpu_custom_call.1} parent=71 // pred_fallthru
          _
      $region72: #{tpu_custom_call.1} parent=5 // pred_fallthru
        _
    $region6: #{tpu_custom_call.1} parent=1 // loop_footer
      %s27 = sadd.s32 1, %s23
    $region7: #{tpu_custom_call.1} parent=1 // loop_footer_branch
      %22 = sbr.rel target = $region3
    $region8: #{tpu_custom_call.1} parent=1 // loop_exit
      _
    %1697 = vsyncpa [#allocation3], 1
    %s1698 = scalar_lea.sflag [#allocation3], 1
    %1699 = vsyncpa %s1698, 1
    %1700 = vsyncpa [#allocation6], 1
    %s1701 = scalar_lea.sflag [#allocation6], 1
    %1702 = vsyncpa %s1701, 1
    %1703 = vsyncpa [#allocation9], 1
    %1704 = vsyncpa [#allocation4], 1
    %s1705 = scalar_lea.sflag [#allocation4], 1
    %1706 = vsyncpa %s1705, 1

</llo_original>
